<compile_context>
chip_gen: v7x
topology: tpu7x:2x2x1
jax: 0.10.0
libtpu: 0.0.40
codegen_flags: <defaults>
</compile_context>

<pallas_src>
import jax
import jax.numpy as jnp
from jax import lax
from jax.experimental import pallas as pl
from jax.experimental.pallas import tpu as pltpu

LANE = 128


def _round_up(x, m):
    return ((x + m - 1) // m) * m


def _ppn_head_kernel(x_ref,
                     w1s_ref, b1s_ref, w2s_ref, b2s_ref,
                     w1o_ref, b1o_ref, w2o_ref, b2o_ref,
                     out_ref):
    """One segment per grid step:
       sub_emb = Linear->ReLU->Linear(x); obj_emb likewise;
       out = sigmoid(sub_emb @ obj_emb.T)  (contraction via dot_general, no transpose)."""
    x = x_ref[0]                                                   # (N_pad, C_pad)

    # subject embedding branch
    h_s = jnp.dot(x, w1s_ref[...], preferred_element_type=jnp.float32) + b1s_ref[...]
    h_s = jnp.maximum(h_s, 0.0)                                    # ReLU(inplace=True)
    sub_emb = jnp.dot(h_s, w2s_ref[...],
                      preferred_element_type=jnp.float32) + b2s_ref[...]

    # object embedding branch
    h_o = jnp.dot(x, w1o_ref[...], preferred_element_type=jnp.float32) + b1o_ref[...]
    h_o = jnp.maximum(h_o, 0.0)
    obj_emb = jnp.dot(h_o, w2o_ref[...],
                      preferred_element_type=jnp.float32) + b2o_ref[...]

    # pair_matrix = sigmoid(sub_emb @ obj_emb.T), contracting last dims directly.
    # (On v6e/v7x, casting sub_emb/obj_emb to bf16 here roughly doubles MXU throughput
    #  for large N; kept f32 to match the reference bit-for-bit at these sizes.)
    pair = lax.dot_general(sub_emb, obj_emb,
                           dimension_numbers=(((1,), (1,)), ((), ())),
                           preferred_element_type=jnp.float32)
    out_ref[0] = jax.nn.sigmoid(pair)


def ppn_head_pallas_batched(x_batched, params_padded):
    """x_batched: (S, N_pad, C_pad) padded/stacked track_cls_logits.
       Returns (S, N_pad, N_pad) sigmoid pair matrices."""
    S, N_pad, C_pad = x_batched.shape
    H_pad = params_padded["w1s"].shape[1]
    D_pad = params_padded["w2s"].shape[1]

    operands = (
        x_batched,
        params_padded["w1s"], params_padded["b1s"],
        params_padded["w2s"], params_padded["b2s"],
        params_padded["w1o"], params_padded["b1o"],
        params_padded["w2o"], params_padded["b2o"],
    )

    in_specs = [
        # per-segment activations: one (N_pad, C_pad) slab per grid step
        pl.BlockSpec((1, N_pad, C_pad), lambda s: (s, 0, 0)),
        # weights / biases: constant index maps → fetched once, stay VMEM-resident
        pl.BlockSpec((C_pad, H_pad), lambda s: (0, 0)),
        pl.BlockSpec((1, H_pad), lambda s: (0, 0)),
        pl.BlockSpec((H_pad, D_pad), lambda s: (0, 0)),
        pl.BlockSpec((1, D_pad), lambda s: (0, 0)),
        pl.BlockSpec((C_pad, H_pad), lambda s: (0, 0)),
        pl.BlockSpec((1, H_pad), lambda s: (0, 0)),
        pl.BlockSpec((H_pad, D_pad), lambda s: (0, 0)),
        pl.BlockSpec((1, D_pad), lambda s: (0, 0)),
    ]
    out_spec = pl.BlockSpec((1, N_pad, N_pad), lambda s: (s, 0, 0))

    return pl.pallas_call(
        _ppn_head_kernel,
        out_shape=jax.ShapeDtypeStruct((S, N_pad, N_pad), jnp.float32),
        grid=(S,),
        in_specs=in_specs,
        out_specs=out_spec,
        compiler_params=pltpu.CompilerParams(
            dimension_semantics=("parallel",)),
    )(*operands)


def make_ppn_params(key, in_channels, hidden_channels, out_channels):
    """Deterministic synthetic parameters matching PPNHead's nn.Linear shapes.

    PyTorch nn.Linear(in, out) stores weight (out, in); we keep the transposed
    (in, out) layout so the kernel computes x @ W + b (same math as x @ W_t.T + b)."""
    ks = jax.random.split(key, 8)

    def lin(kw, kb, fan_in, fan_out):
        bound = 1.0 / jnp.sqrt(fan_in)
        w = jax.random.uniform(kw, (fan_in, fan_out), jnp.float32, -bound, bound)
        b = jax.random.uniform(kb, (1, fan_out), jnp.float32, -bound, bound)
        return w, b

    w1s, b1s = lin(ks[0], ks[1], in_channels, hidden_channels)
    w2s, b2s = lin(ks[2], ks[3], hidden_channels, out_channels)
    w1o, b1o = lin(ks[4], ks[5], in_channels, hidden_channels)
    w2o, b2o = lin(ks[6], ks[7], hidden_channels, out_channels)
    return dict(w1s=w1s, b1s=b1s, w2s=w2s, b2s=b2s,
                w1o=w1o, b1o=b1o, w2o=w2o, b2o=b2o)


def _pad_params(params, c_pad, h_pad, d_pad):
    """Zero-pad all weights/biases to lane-friendly shapes (exactness preserved)."""
    def pad2(a, r, c):
        return jnp.pad(a, ((0, r - a.shape[0]), (0, c - a.shape[1])))

    return dict(
        w1s=pad2(params["w1s"], c_pad, h_pad), b1s=pad2(params["b1s"], 1, h_pad),
        w2s=pad2(params["w2s"], h_pad, d_pad), b2s=pad2(params["b2s"], 1, d_pad),
        w1o=pad2(params["w1o"], c_pad, h_pad), b1o=pad2(params["b1o"], 1, h_pad),
        w2o=pad2(params["w2o"], h_pad, d_pad), b2o=pad2(params["b2o"], 1, d_pad),
    )


def ppn_forward_test(cls_logits_list, params, num_pair_proposals):
    """Inference path of PPN.forward: pad+stack all segments, run ONE gridded Pallas call,
    then per segment slice back to (N, N) and take the top-k flattened indices."""
    ns = [int(x.shape[0]) for x in cls_logits_list]
    c_in = int(cls_logits_list[0].shape[1])
    hidden = int(params["w1s"].shape[1])
    out_c = int(params["w2s"].shape[1])

    n_pad = max(LANE, _round_up(max(ns), LANE))
    c_pad = _round_up(c_in, LANE)
    h_pad = _round_up(hidden, LANE)
    d_pad = _round_up(out_c, LANE)

    x_batched = jnp.stack([
        jnp.pad(x, ((0, n_pad - x.shape[0]), (0, c_pad - x.shape[1])))
        for x in cls_logits_list
    ])                                                             # (S, N_pad, C_pad)
    params_padded = _pad_params(params, c_pad, h_pad, d_pad)

    pair_padded = ppn_head_pallas_batched(x_batched, params_padded)  # (S, N_pad, N_pad)

    pair_proposals = []
    pair_matrices = []
    for i, n in enumerate(ns):
        # Slice away padded rows/cols so padding can never be selected as a proposal.
        pair_matrix = pair_padded[i, :n, :n]                       # (N, N)
        pair_matrices.append(pair_matrix)
        # torch.sort(pair_matrix.view(-1), descending=True) -> order[:k]
        _, order = jax.lax.top_k(pair_matrix.reshape(-1), num_pair_proposals)
        pair_proposals.append(order)
    return pair_proposals, pair_matrices


def _reference_head(x, p):
    h_s = jnp.maximum(x @ p["w1s"] + p["b1s"], 0.0)
    sub = h_s @ p["w2s"] + p["b2s"]
    h_o = jnp.maximum(x @ p["w1o"] + p["b1o"], 0.0)
    obj = h_o @ p["w2o"] + p["b2o"]
    return jax.nn.sigmoid(sub @ obj.T)


if __name__ == "__main__":
    # Synthetic cfg: RELPN.PPN.{IN_CHANNELS, HIDDEN_CHANNELS, OUT_CHANNELS, NUM_PAIR_PROPOSALS}
    IN_CHANNELS = 32
    HIDDEN_CHANNELS = 32
    OUT_CHANNELS = 16
    NUM_PAIR_PROPOSALS = 8

    key = jax.random.PRNGKey(0)
    k_params, k_x0, k_x1 = jax.random.split(key, 3)

    params = make_ppn_params(k_params, IN_CHANNELS, HIDDEN_CHANNELS, OUT_CHANNELS)

    # Two "segments" with different numbers of tracklets (track_cls_logits per segment).
    cls_logits_list = [
        jax.random.normal(k_x0, (16, IN_CHANNELS), jnp.float32),
        jax.random.normal(k_x1, (8, IN_CHANNELS), jnp.float32),
    ]

    proposals, pair_matrices = ppn_forward_test(
        cls_logits_list, params, NUM_PAIR_PROPOSALS)
    for p in proposals:
        jax.block_until_ready(p)
    for m in pair_matrices:
        jax.block_until_ready(m)

    # Correctness check against a pure-JAX reference of PPNHead (unpadded math).
    ok = True
    for x, m in zip(cls_logits_list, pair_matrices):
        ref = _reference_head(x, params)
        ok = ok and bool(jnp.allclose(m, ref, atol=1e-5, rtol=1e-5))
        ok = ok and (m.shape == (x.shape[0], x.shape[0]))
    for p in proposals:
        ok = ok and (p.shape == (NUM_PAIR_PROPOSALS,))

    if ok:
        print("KERNEL_OK")
    else:
        print("MISMATCH")
</pallas_src>

<mosaic_0001>
module attributes {stable_mosaic.version = 11 : i64} {
  func.func @_ppn_head_kernel(%arg0: i32, %arg1: memref<1x128x128xf32, #tpu.memory_space<vmem>>, %arg2: memref<128x128xf32, #tpu.memory_space<vmem>>, %arg3: memref<1x128xf32, #tpu.memory_space<vmem>>, %arg4: memref<128x128xf32, #tpu.memory_space<vmem>>, %arg5: memref<1x128xf32, #tpu.memory_space<vmem>>, %arg6: memref<128x128xf32, #tpu.memory_space<vmem>>, %arg7: memref<1x128xf32, #tpu.memory_space<vmem>>, %arg8: memref<128x128xf32, #tpu.memory_space<vmem>>, %arg9: memref<1x128xf32, #tpu.memory_space<vmem>>, %arg10: memref<1x128x128xf32, #tpu.memory_space<vmem>>) attributes {dimension_semantics = [#tpu.dimension_semantics<parallel>], iteration_bounds = array<i64: 2>, scalar_prefetch = 0 : i64, scratch_operands = 0 : i64, tpu.core_type = #tpu.core_type<tc>, window_params = [{transform_indices = @transform_0, window_bounds = array<i64: 1, 128, 128>}, {pipeline_mode = #tpu.pipeline_mode<synchronous>, transform_indices = @transform_1, window_bounds = array<i64: 128, 128>}, {pipeline_mode = #tpu.pipeline_mode<synchronous>, transform_indices = @transform_2, window_bounds = array<i64: 1, 128>}, {pipeline_mode = #tpu.pipeline_mode<synchronous>, transform_indices = @transform_3, window_bounds = array<i64: 128, 128>}, {pipeline_mode = #tpu.pipeline_mode<synchronous>, transform_indices = @transform_4, window_bounds = array<i64: 1, 128>}, {pipeline_mode = #tpu.pipeline_mode<synchronous>, transform_indices = @transform_5, window_bounds = array<i64: 128, 128>}, {pipeline_mode = #tpu.pipeline_mode<synchronous>, transform_indices = @transform_6, window_bounds = array<i64: 1, 128>}, {pipeline_mode = #tpu.pipeline_mode<synchronous>, transform_indices = @transform_7, window_bounds = array<i64: 128, 128>}, {pipeline_mode = #tpu.pipeline_mode<synchronous>, transform_indices = @transform_8, window_bounds = array<i64: 1, 128>}, {transform_indices = @transform_9, window_bounds = array<i64: 1, 128, 128>}]} {
    %c0 = arith.constant 0 : index
    %c0_0 = arith.constant 0 : index
    %c0_1 = arith.constant 0 : index
    %0 = vector.load %arg1[%c0, %c0_0, %c0_1] : memref<1x128x128xf32, #tpu.memory_space<vmem>>, vector<1x128x128xf32>
    %1 = vector.shape_cast %0 : vector<1x128x128xf32> to vector<128x128xf32>
    %c0_2 = arith.constant 0 : index
    %c0_3 = arith.constant 0 : index
    %2 = vector.load %arg2[%c0_2, %c0_3] : memref<128x128xf32, #tpu.memory_space<vmem>>, vector<128x128xf32>
    %cst = arith.constant dense<0.000000e+00> : vector<128x128xf32>
    %3 = tpu.matmul %1, %2, %cst {dimension_numbers = #tpu.dot_dimension_numbers<[1], [0], [0], [1], [0, 0, 1, 1], [], []>} : vector<128x128xf32>, vector<128x128xf32>, vector<128x128xf32> -> vector<128x128xf32>
    %c0_4 = arith.constant 0 : index
    %c0_5 = arith.constant 0 : index
    %4 = vector.load %arg3[%c0_4, %c0_5] : memref<1x128xf32, #tpu.memory_space<vmem>>, vector<1x128xf32>
    %5 = vector.broadcast %4 : vector<1x128xf32> to vector<128x128xf32>
    %6 = arith.addf %3, %5 : vector<128x128xf32>
    %cst_6 = arith.constant 0.000000e+00 : f32
    %7 = vector.broadcast %cst_6 : f32 to vector<128x128xf32>
    %8 = arith.maximumf %6, %7 : vector<128x128xf32>
    %c0_7 = arith.constant 0 : index
    %c0_8 = arith.constant 0 : index
    %9 = vector.load %arg4[%c0_7, %c0_8] : memref<128x128xf32, #tpu.memory_space<vmem>>, vector<128x128xf32>
    %cst_9 = arith.constant dense<0.000000e+00> : vector<128x128xf32>
    %10 = tpu.matmul %8, %9, %cst_9 {dimension_numbers = #tpu.dot_dimension_numbers<[1], [0], [0], [1], [0, 0, 1, 1], [], []>} : vector<128x128xf32>, vector<128x128xf32>, vector<128x128xf32> -> vector<128x128xf32>
    %c0_10 = arith.constant 0 : index
    %c0_11 = arith.constant 0 : index
    %11 = vector.load %arg5[%c0_10, %c0_11] : memref<1x128xf32, #tpu.memory_space<vmem>>, vector<1x128xf32>
    %12 = vector.broadcast %11 : vector<1x128xf32> to vector<128x128xf32>
    %13 = arith.addf %10, %12 : vector<128x128xf32>
    %c0_12 = arith.constant 0 : index
    %c0_13 = arith.constant 0 : index
    %14 = vector.load %arg6[%c0_12, %c0_13] : memref<128x128xf32, #tpu.memory_space<vmem>>, vector<128x128xf32>
    %cst_14 = arith.constant dense<0.000000e+00> : vector<128x128xf32>
    %15 = tpu.matmul %1, %14, %cst_14 {dimension_numbers = #tpu.dot_dimension_numbers<[1], [0], [0], [1], [0, 0, 1, 1], [], []>} : vector<128x128xf32>, vector<128x128xf32>, vector<128x128xf32> -> vector<128x128xf32>
    %c0_15 = arith.constant 0 : index
    %c0_16 = arith.constant 0 : index
    %16 = vector.load %arg7[%c0_15, %c0_16] : memref<1x128xf32, #tpu.memory_space<vmem>>, vector<1x128xf32>
    %17 = vector.broadcast %16 : vector<1x128xf32> to vector<128x128xf32>
    %18 = arith.addf %15, %17 : vector<128x128xf32>
    %cst_17 = arith.constant 0.000000e+00 : f32
    %19 = vector.broadcast %cst_17 : f32 to vector<128x128xf32>
    %20 = arith.maximumf %18, %19 : vector<128x128xf32>
    %c0_18 = arith.constant 0 : index
    %c0_19 = arith.constant 0 : index
    %21 = vector.load %arg8[%c0_18, %c0_19] : memref<128x128xf32, #tpu.memory_space<vmem>>, vector<128x128xf32>
    %cst_20 = arith.constant dense<0.000000e+00> : vector<128x128xf32>
    %22 = tpu.matmul %20, %21, %cst_20 {dimension_numbers = #tpu.dot_dimension_numbers<[1], [0], [0], [1], [0, 0, 1, 1], [], []>} : vector<128x128xf32>, vector<128x128xf32>, vector<128x128xf32> -> vector<128x128xf32>
    %c0_21 = arith.constant 0 : index
    %c0_22 = arith.constant 0 : index
    %23 = vector.load %arg9[%c0_21, %c0_22] : memref<1x128xf32, #tpu.memory_space<vmem>>, vector<1x128xf32>
    %24 = vector.broadcast %23 : vector<1x128xf32> to vector<128x128xf32>
    %25 = arith.addf %22, %24 : vector<128x128xf32>
    %cst_23 = arith.constant dense<0.000000e+00> : vector<128x128xf32>
    %26 = tpu.matmul %13, %25, %cst_23 {dimension_numbers = #tpu.dot_dimension_numbers<[1], [1], [0], [0], [0, 0, 1, 0], [], []>} : vector<128x128xf32>, vector<128x128xf32>, vector<128x128xf32> -> vector<128x128xf32>
    %27 = arith.negf %26 : vector<128x128xf32>
    %28 = math.exp %27 : vector<128x128xf32>
    %cst_24 = arith.constant 1.000000e+00 : f32
    %29 = vector.broadcast %cst_24 : f32 to vector<128x128xf32>
    %30 = arith.addf %29, %28 : vector<128x128xf32>
    %31 = arith.divf %29, %30 : vector<128x128xf32>
    %c0_25 = arith.constant 0 : index
    %c0_26 = arith.constant 0 : index
    %c0_27 = arith.constant 0 : index
    %32 = vector.load %arg10[%c0_25, %c0_26, %c0_27] : memref<1x128x128xf32, #tpu.memory_space<vmem>>, vector<1x128x128xf32>
    %33 = vector.shape_cast %32 : vector<1x128x128xf32> to vector<128x128xf32>
    %34 = vector.shape_cast %31 : vector<128x128xf32> to vector<1x128x128xf32>
    tpu.vector_store %arg10[%c0_25, %c0_26, %c0_27], %34 {strides = array<i32>} : memref<1x128x128xf32, #tpu.memory_space<vmem>>, vector<1x128x128xf32>,
    return
  }
  func.func @transform_0(%arg0: i32) -> (i32, i32, i32) {
    %c0_i32 = arith.constant 0 : i32
    %c0_i32_0 = arith.constant 0 : i32
    %c0_i32_1 = arith.constant 0 : i32
    return %arg0, %c0_i32, %c0_i32_0 : i32, i32, i32
  }
  func.func @transform_1(%arg0: i32) -> (i32, i32) {
    %c0_i32 = arith.constant 0 : i32
    %c0_i32_0 = arith.constant 0 : i32
    %c0_i32_1 = arith.constant 0 : i32
    return %c0_i32, %c0_i32_0 : i32, i32
  }
  func.func @transform_2(%arg0: i32) -> (i32, i32) {
    %c0_i32 = arith.constant 0 : i32
    %c0_i32_0 = arith.constant 0 : i32
    %c0_i32_1 = arith.constant 0 : i32
    return %c0_i32, %c0_i32_0 : i32, i32
  }
  func.func @transform_3(%arg0: i32) -> (i32, i32) {
    %c0_i32 = arith.constant 0 : i32
    %c0_i32_0 = arith.constant 0 : i32
    %c0_i32_1 = arith.constant 0 : i32
    return %c0_i32, %c0_i32_0 : i32, i32
  }
  func.func @transform_4(%arg0: i32) -> (i32, i32) {
    %c0_i32 = arith.constant 0 : i32
    %c0_i32_0 = arith.constant 0 : i32
    %c0_i32_1 = arith.constant 0 : i32
    return %c0_i32, %c0_i32_0 : i32, i32
  }
  func.func @transform_5(%arg0: i32) -> (i32, i32) {
    %c0_i32 = arith.constant 0 : i32
    %c0_i32_0 = arith.constant 0 : i32
    %c0_i32_1 = arith.constant 0 : i32
    return %c0_i32, %c0_i32_0 : i32, i32
  }
  func.func @transform_6(%arg0: i32) -> (i32, i32) {
    %c0_i32 = arith.constant 0 : i32
    %c0_i32_0 = arith.constant 0 : i32
    %c0_i32_1 = arith.constant 0 : i32
    return %c0_i32, %c0_i32_0 : i32, i32
  }
  func.func @transform_7(%arg0: i32) -> (i32, i32) {
    %c0_i32 = arith.constant 0 : i32
    %c0_i32_0 = arith.constant 0 : i32
    %c0_i32_1 = arith.constant 0 : i32
    return %c0_i32, %c0_i32_0 : i32, i32
  }
  func.func @transform_8(%arg0: i32) -> (i32, i32) {
    %c0_i32 = arith.constant 0 : i32
    %c0_i32_0 = arith.constant 0 : i32
    %c0_i32_1 = arith.constant 0 : i32
    return %c0_i32, %c0_i32_0 : i32, i32
  }
  func.func @transform_9(%arg0: i32) -> (i32, i32, i32) {
    %c0_i32 = arith.constant 0 : i32
    %c0_i32_0 = arith.constant 0 : i32
    %c0_i32_1 = arith.constant 0 : i32
    return %arg0, %c0_i32, %c0_i32_0 : i32, i32, i32
  }
}

</mosaic_0001>

<llo_original>
// kernel: tpu_custom_call.1
$region0: #{tpu_custom_call.1}
  #allocation0 [shape = 'u32[]', space=smem, size = 0x4, offset = 0x4, fixed_abs, tag = 'smem constant byte address 0x4 - core index']
  #allocation1 [shape = 'u32[144,128]{1,0:T(1,128)}', space=vmem, size = 0x12000, scoped, tag = 'internal scratch']
  %s0 = inlined_call_operand.hbm [shape: f32[2,128,128], index: 0, kind: input, shape index: {}]
  %s1 = inlined_call_operand.hbm [shape: f32[128,128], index: 1, kind: input, shape index: {}]
  %s2 = inlined_call_operand.vmem [shape: f32[1,128], index: 2, kind: input, shape index: {}]
  %s3 = inlined_call_operand.hbm [shape: f32[128,128], index: 3, kind: input, shape index: {}]
  %s4 = inlined_call_operand.vmem [shape: f32[1,128], index: 4, kind: input, shape index: {}]
  %s5 = inlined_call_operand.hbm [shape: f32[128,128], index: 5, kind: input, shape index: {}]
  %s6 = inlined_call_operand.vmem [shape: f32[1,128], index: 6, kind: input, shape index: {}]
  %s7 = inlined_call_operand.hbm [shape: f32[128,128], index: 7, kind: input, shape index: {}]
  %s8 = inlined_call_operand.vmem [shape: f32[1,128], index: 8, kind: input, shape index: {}]
  %s9 = inlined_call_operand.hbm [shape: f32[2,128,128], index: 9, kind: output, shape index: {}]
  %s10 = sld [smem:[#allocation0]]
  $region89: #{tpu_custom_call.1} parent=0
    _
  %s12 = ssub.s32 1, %s10
  %s13 = scalar_select 0, %s12, %s10
  $region1: #{tpu_custom_call.1} parent=0
    #allocation2 [shape = 'u8[131072]{0}', space=vmem, size = 0x20000, scoped, tag = 'input window, operand 0']
    #allocation3 [shape = 's32[2]{0}', space=sflag, size = 0x8, scoped, tag = 'scoped memory for tpu_custom_call.1']
    #allocation4 [shape = 's32[2]{0}', space=sflag, size = 0x8, scoped, tag = 'scoped memory for tpu_custom_call.1']
    #allocation5 [shape = 'u8[65536]{0}', space=vmem, size = 0x10000, scoped, tag = 'input window, operand 1, single buffered']
    #allocation6 [shape = 's32[1]{0}', space=sflag, size = 0x4, scoped, tag = 'scoped memory for tpu_custom_call.1']
    #allocation7 [shape = 'u8[65536]{0}', space=vmem, size = 0x10000, scoped, tag = 'input window, operand 3, single buffered']
    #allocation8 [shape = 'u8[65536]{0}', space=vmem, size = 0x10000, scoped, tag = 'input window, operand 5, single buffered']
    #allocation9 [shape = 's32[1]{0}', space=sflag, size = 0x4, scoped, tag = 'scoped memory for tpu_custom_call.1']
    #allocation10 [shape = 'u8[65536]{0}', space=vmem, size = 0x10000, scoped, tag = 'input window, operand 7, single buffered']
    #allocation11 [shape = 'u8[131072]{0}', space=vmem, size = 0x20000, scoped, tag = 'output window, operand 0']
    %14 = vsyncpa [#allocation3], 0
    %s15 = scalar_lea.sflag [#allocation3], 1
    %16 = vsyncpa %s15, 0
    %17 = vsyncpa [#allocation6], 0
    %18 = vsyncpa [#allocation9], 0
    %19 = vsyncpa [#allocation4], 0
    %s20 = scalar_lea.sflag [#allocation4], 1
    %21 = vsyncpa %s20, 0
    loop: start=0, step=1, limit=4
    $region2: #{tpu_custom_call.1} parent=1 // loop_pre_header
      _
    $region3: #{tpu_custom_call.1} parent=1 // loop_header
      %s23 = sphi 0, %s27
      %p24 = scmp.ge.s32.totalorder %s23, 4
      %s33 = sphi 0, %s35
      %s36 = sphi 0, %s33
      %s37 = sphi 0, %s36
      %s53 = sphi 0, %s37
      %s57 = sphi 0, %s57
      %s59 = sphi 0, %s57
      %s60 = sphi 0, %s59
      %s74 = sphi 0, %s60
      %s78 = sphi 0, %s78
      %s80 = sphi 0, %s78
      %s81 = sphi 0, %s80
      %s95 = sphi 0, %s81
      %s99 = sphi 0, %s99
      %s101 = sphi 0, %s99
      %s102 = sphi 0, %s101
      %s116 = sphi 0, %s102
      %s120 = sphi 0, %s120
      %s122 = sphi 0, %s120
      %s123 = sphi 0, %s122
      %s137 = sphi 0, %s123
      %s141 = sphi 0, %s141
      %s143 = sphi 0, %s141
      %s144 = sphi 0, %s143
      %s158 = sphi 0, %s144
      %s162 = sphi 0, %s162
      %s164 = sphi 0, %s162
      %s165 = sphi 0, %s164
      %s179 = sphi 0, %s165
      %s183 = sphi 0, %s183
      %s185 = sphi 0, %s183
      %s186 = sphi 0, %s185
      %s200 = sphi 0, %s186
      %s204 = sphi 0, %s204
      %s206 = sphi 0, %s204
      %s207 = sphi 0, %s206
      %s221 = sphi 0, %s207
      %s227 = sphi 0, %s229
      %s230 = sphi 0, %s227
      %s231 = sphi 0, %s230
      %s247 = sphi 0, %s231
    $region4: #{tpu_custom_call.1} parent=1 // loop_header_branch
      %26 = sbr.rel (%p24) target = $region8
    $region5: #{tpu_custom_call.1} parent=1 // loop_body
      %s28 = ssub.s32 %s23, 1
      %s29 = ssub.s32 %s23, 2
      %s30 = sadd.s32 %s23, 1
      %s31 = ssub.s32 %s23, %s30
      %p32 = scmp.eq.s32.totalorder %s31, 0
      %s34 = sadd.s32 %s33, 1
      %s35 = scalar_select %p32, %s33, %s34
      %p38 = pneg %p32
      %p39 = scmp.eq.s32.totalorder %s23, 1
      %p40 = por %p38, %p39
      %p41 = scmp.ne.s32.totalorder %s33, %s36
      %p42 = scmp.eq.s32.totalorder %s23, 0
      %p43 = por %p41, %p42
      %p44 = scmp.ne.s32.totalorder %s33, %s36
      %p45 = scmp.eq.s32.totalorder %s28, 1
      %p46 = por %p44, %p45
      %p47 = scmp.ne.s32.totalorder %s36, %s37
      %p48 = scmp.eq.s32.totalorder %s28, 0
      %p49 = por %p47, %p48
      %p50 = scmp.ne.s32.totalorder %s36, %s37
      %p51 = scmp.eq.s32.totalorder %s29, 1
      %p52 = por %p50, %p51
      %p54 = scmp.ne.s32.totalorder %s37, %s53
      %p55 = scmp.eq.s32.totalorder %s29, 0
      %p56 = por %p54, %p55
      %s58 = sadd.s32 %s57, 1
      %p61 = scmp.eq.s32.totalorder %s23, 1
      %p62 = scmp.ne.s32.totalorder %s57, %s59
      %p63 = scmp.eq.s32.totalorder %s23, 0
      %p64 = por %p62, %p63
      %p65 = scmp.ne.s32.totalorder %s57, %s59
      %p66 = scmp.eq.s32.totalorder %s28, 1
      %p67 = por %p65, %p66
      %p68 = scmp.ne.s32.totalorder %s59, %s60
      %p69 = scmp.eq.s32.totalorder %s28, 0
      %p70 = por %p68, %p69
      %p71 = scmp.ne.s32.totalorder %s59, %s60
      %p72 = scmp.eq.s32.totalorder %s29, 1
      %p73 = por %p71, %p72
      %p75 = scmp.ne.s32.totalorder %s60, %s74
      %p76 = scmp.eq.s32.totalorder %s29, 0
      %p77 = por %p75, %p76
      %s79 = sadd.s32 %s78, 1
      %p82 = scmp.eq.s32.totalorder %s23, 1
      %p83 = scmp.ne.s32.totalorder %s78, %s80
      %p84 = scmp.eq.s32.totalorder %s23, 0
      %p85 = por %p83, %p84
      %p86 = scmp.ne.s32.totalorder %s78, %s80
      %p87 = scmp.eq.s32.totalorder %s28, 1
      %p88 = por %p86, %p87
      %p89 = scmp.ne.s32.totalorder %s80, %s81
      %p90 = scmp.eq.s32.totalorder %s28, 0
      %p91 = por %p89, %p90
      %p92 = scmp.ne.s32.totalorder %s80, %s81
      %p93 = scmp.eq.s32.totalorder %s29, 1
      %p94 = por %p92, %p93
      %p96 = scmp.ne.s32.totalorder %s81, %s95
      %p97 = scmp.eq.s32.totalorder %s29, 0
      %p98 = por %p96, %p97
      %s100 = sadd.s32 %s99, 1
      %p103 = scmp.eq.s32.totalorder %s23, 1
      %p104 = scmp.ne.s32.totalorder %s99, %s101
      %p105 = scmp.eq.s32.totalorder %s23, 0
      %p106 = por %p104, %p105
      %p107 = scmp.ne.s32.totalorder %s99, %s101
      %p108 = scmp.eq.s32.totalorder %s28, 1
      %p109 = por %p107, %p108
      %p110 = scmp.ne.s32.totalorder %s101, %s102
      %p111 = scmp.eq.s32.totalorder %s28, 0
      %p112 = por %p110, %p111
      %p113 = scmp.ne.s32.totalorder %s101, %s102
      %p114 = scmp.eq.s32.totalorder %s29, 1
      %p115 = por %p113, %p114
      %p117 = scmp.ne.s32.totalorder %s102, %s116
      %p118 = scmp.eq.s32.totalorder %s29, 0
      %p119 = por %p117, %p118
      %s121 = sadd.s32 %s120, 1
      %p124 = scmp.eq.s32.totalorder %s23, 1
      %p125 = scmp.ne.s32.totalorder %s120, %s122
      %p126 = scmp.eq.s32.totalorder %s23, 0
      %p127 = por %p125, %p126
      %p128 = scmp.ne.s32.totalorder %s120, %s122
      %p129 = scmp.eq.s32.totalorder %s28, 1
      %p130 = por %p128, %p129
      %p131 = scmp.ne.s32.totalorder %s122, %s123
      %p132 = scmp.eq.s32.totalorder %s28, 0
      %p133 = por %p131, %p132
      %p134 = scmp.ne.s32.totalorder %s122, %s123
      %p135 = scmp.eq.s32.totalorder %s29, 1
      %p136 = por %p134, %p135
      %p138 = scmp.ne.s32.totalorder %s123, %s137
      %p139 = scmp.eq.s32.totalorder %s29, 0
      %p140 = por %p138, %p139
      %s142 = sadd.s32 %s141, 1
      %p145 = scmp.eq.s32.totalorder %s23, 1
      %p146 = scmp.ne.s32.totalorder %s141, %s143
      %p147 = scmp.eq.s32.totalorder %s23, 0
      %p148 = por %p146, %p147
      %p149 = scmp.ne.s32.totalorder %s141, %s143
      %p150 = scmp.eq.s32.totalorder %s28, 1
      %p151 = por %p149, %p150
      %p152 = scmp.ne.s32.totalorder %s143, %s144
      %p153 = scmp.eq.s32.totalorder %s28, 0
      %p154 = por %p152, %p153
      %p155 = scmp.ne.s32.totalorder %s143, %s144
      %p156 = scmp.eq.s32.totalorder %s29, 1
      %p157 = por %p155, %p156
      %p159 = scmp.ne.s32.totalorder %s144, %s158
      %p160 = scmp.eq.s32.totalorder %s29, 0
      %p161 = por %p159, %p160
      %s163 = sadd.s32 %s162, 1
      %p166 = scmp.eq.s32.totalorder %s23, 1
      %p167 = scmp.ne.s32.totalorder %s162, %s164
      %p168 = scmp.eq.s32.totalorder %s23, 0
      %p169 = por %p167, %p168
      %p170 = scmp.ne.s32.totalorder %s162, %s164
      %p171 = scmp.eq.s32.totalorder %s28, 1
      %p172 = por %p170, %p171
      %p173 = scmp.ne.s32.totalorder %s164, %s165
      %p174 = scmp.eq.s32.totalorder %s28, 0
      %p175 = por %p173, %p174
      %p176 = scmp.ne.s32.totalorder %s164, %s165
      %p177 = scmp.eq.s32.totalorder %s29, 1
      %p178 = por %p176, %p177
      %p180 = scmp.ne.s32.totalorder %s165, %s179
      %p181 = scmp.eq.s32.totalorder %s29, 0
      %p182 = por %p180, %p181
      %s184 = sadd.s32 %s183, 1
      %p187 = scmp.eq.s32.totalorder %s23, 1
      %p188 = scmp.ne.s32.totalorder %s183, %s185
      %p189 = scmp.eq.s32.totalorder %s23, 0
      %p190 = por %p188, %p189
      %p191 = scmp.ne.s32.totalorder %s183, %s185
      %p192 = scmp.eq.s32.totalorder %s28, 1
      %p193 = por %p191, %p192
      %p194 = scmp.ne.s32.totalorder %s185, %s186
      %p195 = scmp.eq.s32.totalorder %s28, 0
      %p196 = por %p194, %p195
      %p197 = scmp.ne.s32.totalorder %s185, %s186
      %p198 = scmp.eq.s32.totalorder %s29, 1
      %p199 = por %p197, %p198
      %p201 = scmp.ne.s32.totalorder %s186, %s200
      %p202 = scmp.eq.s32.totalorder %s29, 0
      %p203 = por %p201, %p202
      %s205 = sadd.s32 %s204, 1
      %p208 = scmp.eq.s32.totalorder %s23, 1
      %p209 = scmp.ne.s32.totalorder %s204, %s206
      %p210 = scmp.eq.s32.totalorder %s23, 0
      %p211 = por %p209, %p210
      %p212 = scmp.ne.s32.totalorder %s204, %s206
      %p213 = scmp.eq.s32.totalorder %s28, 1
      %p214 = por %p212, %p213
      %p215 = scmp.ne.s32.totalorder %s206, %s207
      %p216 = scmp.eq.s32.totalorder %s28, 0
      %p217 = por %p215, %p216
      %p218 = scmp.ne.s32.totalorder %s206, %s207
      %p219 = scmp.eq.s32.totalorder %s29, 1
      %p220 = por %p218, %p219
      %p222 = scmp.ne.s32.totalorder %s207, %s221
      %p223 = scmp.eq.s32.totalorder %s29, 0
      %p224 = por %p222, %p223
      %s225 = ssub.s32 %s23, %s30
      %p226 = scmp.eq.s32.totalorder %s225, 0
      %s228 = sadd.s32 %s227, 1
      %s229 = scalar_select %p226, %s227, %s228
      %p232 = pneg %p226
      %p233 = scmp.eq.s32.totalorder %s23, 1
      %p234 = por %p232, %p233
      %p235 = scmp.ne.s32.totalorder %s227, %s230
      %p236 = scmp.eq.s32.totalorder %s23, 0
      %p237 = por %p235, %p236
      %p238 = scmp.ne.s32.totalorder %s227, %s230
      %p239 = scmp.eq.s32.totalorder %s28, 1
      %p240 = por %p238, %p239
      %p241 = scmp.ne.s32.totalorder %s230, %s231
      %p242 = scmp.eq.s32.totalorder %s28, 0
      %p243 = por %p241, %p242
      %p244 = scmp.ne.s32.totalorder %s230, %s231
      %p245 = scmp.eq.s32.totalorder %s29, 1
      %p246 = por %p244, %p245
      %p248 = scmp.ne.s32.totalorder %s231, %s247
      %p249 = scmp.eq.s32.totalorder %s29, 0
      %p250 = por %p248, %p249
      %p251 = scmp.le.s32.totalorder 1, %s23
      %p252 = scmp.lt.s32.totalorder %s23, 3
      %p253 = pnand %p251, %p252
      %p254 = pneg %p253
      // Predicated region
      $region9: #{tpu_custom_call.1} parent=5 // pred_check
        _
      $region10: #{tpu_custom_call.1} parent=5 // pred_check_branch
        %256 = sbr.rel (%p253) target = $region12
      $region11: #{tpu_custom_call.1} parent=5 // pred_region
        %s257 = ssub.s32 %s23, 1
        // Predicated region
        $region13: #{tpu_custom_call.1} parent=11 // pred_check
          %p258 = pneg %p70
        $region14: #{tpu_custom_call.1} parent=11 // pred_check_branch
          %260 = sbr.rel (%p258) target = $region16
        $region15: #{tpu_custom_call.1} parent=11 // pred_region
          %s262 = ssub.s32 2048, 2048
          %263 = vsyncadd [#allocation6], %s262
          %s264 = sshll.u32 [#allocation5], 4
          %s265 = int_to_ptr.vmem [resolvable:$true] %s264
          %270 = dma.hbm_to_vmem [thread:$0]  %s1, 2048, %s265, [#allocation6], 128, 128, 8
        $region16: #{tpu_custom_call.1} parent=11 // pred_fallthru
          _
        // Predicated region
        $region17: #{tpu_custom_call.1} parent=11 // pred_check
          %p271 = pneg %p91
        $region18: #{tpu_custom_call.1} parent=11 // pred_check_branch
          %273 = sbr.rel (%p271) target = $region20
        $region19: #{tpu_custom_call.1} parent=11 // pred_region
          _
        $region20: #{tpu_custom_call.1} parent=11 // pred_fallthru
          _
        // Predicated region
        $region21: #{tpu_custom_call.1} parent=11 // pred_check
          %p274 = pneg %p112
        $region22: #{tpu_custom_call.1} parent=11 // pred_check_branch
          %276 = sbr.rel (%p274) target = $region24
        $region23: #{tpu_custom_call.1} parent=11 // pred_region
          %s278 = ssub.s32 2048, 2048
          %279 = vsyncadd [#allocation6], %s278
          %s280 = sshll.u32 [#allocation7], 4
          %s281 = int_to_ptr.vmem [resolvable:$true] %s280
          %286 = dma.hbm_to_vmem [thread:$0]  %s3, 2048, %s281, [#allocation6], 128, 128, 8
        $region24: #{tpu_custom_call.1} parent=11 // pred_fallthru
          _
        // Predicated region
        $region25: #{tpu_custom_call.1} parent=11 // pred_check
          %p287 = pneg %p133
        $region26: #{tpu_custom_call.1} parent=11 // pred_check_branch
          %289 = sbr.rel (%p287) target = $region28
        $region27: #{tpu_custom_call.1} parent=11 // pred_region
          _
        $region28: #{tpu_custom_call.1} parent=11 // pred_fallthru
          _
        // Predicated region
        $region29: #{tpu_custom_call.1} parent=11 // pred_check
          %p290 = pneg %p154
        $region30: #{tpu_custom_call.1} parent=11 // pred_check_branch
          %292 = sbr.rel (%p290) target = $region32
        $region31: #{tpu_custom_call.1} parent=11 // pred_region
          %s294 = ssub.s32 2048, 2048
          %295 = vsyncadd [#allocation9], %s294
          %s296 = sshll.u32 [#allocation8], 4
          %s297 = int_to_ptr.vmem [resolvable:$true] %s296
          %302 = dma.hbm_to_vmem [thread:$0]  %s5, 2048, %s297, [#allocation9], 128, 128, 8
        $region32: #{tpu_custom_call.1} parent=11 // pred_fallthru
          _
        // Predicated region
        $region33: #{tpu_custom_call.1} parent=11 // pred_check
          %p303 = pneg %p175
        $region34: #{tpu_custom_call.1} parent=11 // pred_check_branch
          %305 = sbr.rel (%p303) target = $region36
        $region35: #{tpu_custom_call.1} parent=11 // pred_region
          _
        $region36: #{tpu_custom_call.1} parent=11 // pred_fallthru
          _
        // Predicated region
        $region37: #{tpu_custom_call.1} parent=11 // pred_check
          %p306 = pneg %p196
        $region38: #{tpu_custom_call.1} parent=11 // pred_check_branch
          %308 = sbr.rel (%p306) target = $region40
        $region39: #{tpu_custom_call.1} parent=11 // pred_region
          %s310 = ssub.s32 2048, 2048
          %311 = vsyncadd [#allocation9], %s310
          %s312 = sshll.u32 [#allocation10], 4
          %s313 = int_to_ptr.vmem [resolvable:$true] %s312
          %318 = dma.hbm_to_vmem [thread:$0]  %s7, 2048, %s313, [#allocation9], 128, 128, 8
        $region40: #{tpu_custom_call.1} parent=11 // pred_fallthru
          _
        // Predicated region
        $region41: #{tpu_custom_call.1} parent=11 // pred_check
          %p319 = pneg %p217
        $region42: #{tpu_custom_call.1} parent=11 // pred_check_branch
          %321 = sbr.rel (%p319) target = $region44
        $region43: #{tpu_custom_call.1} parent=11 // pred_region
          _
        $region44: #{tpu_custom_call.1} parent=11 // pred_fallthru
          _
      $region12: #{tpu_custom_call.1} parent=5 // pred_fallthru
        _
      %p322 = scmp.lt.s32.totalorder %s23, 2
      // Predicated region
      $region45: #{tpu_custom_call.1} parent=5 // pred_check
        %p323 = pneg %p322
      $region46: #{tpu_custom_call.1} parent=5 // pred_check_branch
        %325 = sbr.rel (%p323) target = $region48
      $region47: #{tpu_custom_call.1} parent=5 // pred_region
        // Predicated region
        $region49: #{tpu_custom_call.1} parent=47 // pred_check
          %p326 = pneg %p43
        $region50: #{tpu_custom_call.1} parent=47 // pred_check_branch
          %328 = sbr.rel (%p326) target = $region52
        $region51: #{tpu_custom_call.1} parent=47 // pred_region
          %s329 = sand.u32 %s33, 1
          %s330 = scalar_lea.sflag [#allocation3], %s329
          %s331 = sand.u32 %s33, 1
          %s332 = smul.addr %s331, 128
          %s333 = scalar_lea.vmem [#allocation2], %s332
          %s335 = ssub.s32 2048, 2048
          %336 = vsyncadd %s330, %s335
          %s337 = smul.addr %s23, 16
          %s338 = smul.addr %s337, 128
          %s339 = scalar_lea.hbm %s0, %s338
          %s340 = sshll.u32 %s333, 4
          %s341 = int_to_ptr.vmem [resolvable:$true] %s340
          %346 = dma.hbm_to_vmem [thread:$0]  %s339, 2048, %s341, %s330, 128, 128, 8
        $region52: #{tpu_custom_call.1} parent=47 // pred_fallthru
          _
      $region48: #{tpu_custom_call.1} parent=5 // pred_fallthru
        _
      %p347 = scmp.le.s32.totalorder 1, %s23
      %p348 = scmp.lt.s32.totalorder %s23, 3
      %p349 = pnand %p347, %p348
      %p350 = pneg %p349
      // Predicated region
      $region53: #{tpu_custom_call.1} parent=5 // pred_check
        _
      $region54: #{tpu_custom_call.1} parent=5 // pred_check_branch
        %352 = sbr.rel (%p349) target = $region56
      $region55: #{tpu_custom_call.1} parent=5 // pred_region
        %s353 = ssub.s32 %s23, 1
        %s354 = sand.u32 %s36, 1
        %s355 = scalar_lea.sflag [#allocation3], %s354
        %s356 = sand.u32 %s36, 1
        %s357 = smul.addr %s356, 128
        %s358 = scalar_lea.vmem [#allocation2], %s357
        // Predicated region
        $region57: #{tpu_custom_call.1} parent=55 // pred_check
          %p359 = pneg %p49
        $region58: #{tpu_custom_call.1} parent=55 // pred_check_branch
          %361 = sbr.rel (%p359) target = $region60
        $region59: #{tpu_custom_call.1} parent=55 // pred_region
          %362 = dma.done %s355, 2048
        $region60: #{tpu_custom_call.1} parent=55 // pred_fallthru
          _
        // Predicated region
        $region61: #{tpu_custom_call.1} parent=55 // pred_check
          %p363 = pneg %p70
        $region62: #{tpu_custom_call.1} parent=55 // pred_check_branch
          %365 = sbr.rel (%p363) target = $region64
        $region63: #{tpu_custom_call.1} parent=55 // pred_region
          %366 = dma.done [#allocation6], 2048
        $region64: #{tpu_custom_call.1} parent=55 // pred_fallthru
          _
        // Predicated region
        $region65: #{tpu_custom_call.1} parent=55 // pred_check
          %p367 = pneg %p112
        $region66: #{tpu_custom_call.1} parent=55 // pred_check_branch
          %369 = sbr.rel (%p367) target = $region68
        $region67: #{tpu_custom_call.1} parent=55 // pred_region
          %370 = dma.done [#allocation6], 2048
        $region68: #{tpu_custom_call.1} parent=55 // pred_fallthru
          _
        // Predicated region
        $region69: #{tpu_custom_call.1} parent=55 // pred_check
          %p371 = pneg %p154
        $region70: #{tpu_custom_call.1} parent=55 // pred_check_branch
          %373 = sbr.rel (%p371) target = $region72
        $region71: #{tpu_custom_call.1} parent=55 // pred_region
          %374 = dma.done [#allocation9], 2048
        $region72: #{tpu_custom_call.1} parent=55 // pred_fallthru
          _
        // Predicated region
        $region73: #{tpu_custom_call.1} parent=55 // pred_check
          %p375 = pneg %p196
        $region74: #{tpu_custom_call.1} parent=55 // pred_check_branch
          %377 = sbr.rel (%p375) target = $region76
        $region75: #{tpu_custom_call.1} parent=55 // pred_region
          %378 = dma.done [#allocation9], 2048
        $region76: #{tpu_custom_call.1} parent=55 // pred_fallthru
          _
        %s379 = sand.u32 %s36, 1
        %s380 = scalar_lea.sflag [#allocation3], %s379
        %s381 = sand.u32 %s36, 1
        %s382 = smul.addr %s381, 128
        %s383 = scalar_lea.vmem [#allocation2], %s382
        %p384 = pneg %p49
        %p385 = pneg %p46
        %p386 = pneg %p70
        %p387 = pneg %p67
        %p388 = pneg %p91
        %p389 = pneg %p88
        %p390 = pneg %p112
        %p391 = pneg %p109
        %p392 = pneg %p133
        %p393 = pneg %p130
        %p394 = pneg %p154
        %p395 = pneg %p151
        %p396 = pneg %p175
        %p397 = pneg %p172
        %p398 = pneg %p196
        %p399 = pneg %p193
        %p400 = pneg %p217
        %p401 = pneg %p214
        %p402 = pneg %p243
        %p403 = pneg %p240
        %s404 = sand.u32 %s230, 1
        %s405 = scalar_lea.sflag [#allocation4], %s404
        %s406 = sand.u32 %s230, 1
        %s407 = smul.addr %s406, 128
        %s408 = scalar_lea.vmem [#allocation11], %s407
        %v409 = vld [vmem:[%s358] sm:$0xff]
        %v410 = vld [vmem:[%s358 + $0x8] sm:$0xff]
        %v411 = vld [vmem:[%s358 + $0x10] sm:$0xff]
        %v412 = vld [vmem:[%s358 + $0x18] sm:$0xff]
        %v413 = vld [vmem:[%s358 + $0x20] sm:$0xff]
        %v414 = vld [vmem:[%s358 + $0x28] sm:$0xff]
        %v415 = vld [vmem:[%s358 + $0x30] sm:$0xff]
        %v416 = vld [vmem:[%s358 + $0x38] sm:$0xff]
        %v417 = vld [vmem:[%s358 + $0x40] sm:$0xff]
        %v418 = vld [vmem:[%s358 + $0x48] sm:$0xff]
        %v419 = vld [vmem:[%s358 + $0x50] sm:$0xff]
        %v420 = vld [vmem:[%s358 + $0x58] sm:$0xff]
        %v421 = vld [vmem:[%s358 + $0x60] sm:$0xff]
        %v422 = vld [vmem:[%s358 + $0x68] sm:$0xff]
        %v423 = vld [vmem:[%s358 + $0x70] sm:$0xff]
        %v424 = vld [vmem:[%s358 + $0x78] sm:$0xff]
        %v425 = vld [vmem:[#allocation5] sm:$0xff]
        %v426 = vld [vmem:[#allocation5 + $0x8] sm:$0xff]
        %v427 = vld [vmem:[#allocation5 + $0x10] sm:$0xff]
        %v428 = vld [vmem:[#allocation5 + $0x18] sm:$0xff]
        %v429 = vld [vmem:[#allocation5 + $0x20] sm:$0xff]
        %v430 = vld [vmem:[#allocation5 + $0x28] sm:$0xff]
        %v431 = vld [vmem:[#allocation5 + $0x30] sm:$0xff]
        %v432 = vld [vmem:[#allocation5 + $0x38] sm:$0xff]
        %v433 = vld [vmem:[#allocation5 + $0x40] sm:$0xff]
        %v434 = vld [vmem:[#allocation5 + $0x48] sm:$0xff]
        %v435 = vld [vmem:[#allocation5 + $0x50] sm:$0xff]
        %v436 = vld [vmem:[#allocation5 + $0x58] sm:$0xff]
        %v437 = vld [vmem:[#allocation5 + $0x60] sm:$0xff]
        %v438 = vld [vmem:[#allocation5 + $0x68] sm:$0xff]
        %v439 = vld [vmem:[#allocation5 + $0x70] sm:$0xff]
        %v440 = vld [vmem:[#allocation5 + $0x78] sm:$0xff]
        %v441 = vld [vmem:[%s2] sm:$0x1]
        %v443 = vlaneseq
        %v444 = vshrl.u32 %v443, 7
        %v445 = vsub.s32 0, %v444
        %v446 = vrot.slane %v441, %v445
        %448 = vmatprep.subr.mxu0 0.0
        %449 = vmatpush1.msra.mxu0 %v425
        %450 = vmatprep.subr.mxu0 0.0
        %451 = vmatpush1.msra.mxu0 %v426
        %452 = vmatprep.subr.mxu0 0.0
        %453 = vmatpush1.msra.mxu0 %v427
        %454 = vmatprep.subr.mxu0 0.0
        %455 = vmatpush1.msra.mxu0 %v428
        %456 = vmatprep.subr.mxu0 0.0
        %457 = vmatpush1.msra.mxu0 %v429
        %458 = vmatprep.subr.mxu0 0.0
        %459 = vmatpush1.msra.mxu0 %v430
        %460 = vmatprep.subr.mxu0 0.0
        %461 = vmatpush1.msra.mxu0 %v431
        %462 = vmatprep.subr.mxu0 0.0
        %463 = vmatpush1.msra.mxu0 %v432
        %464 = vmatprep.subr.mxu0 0.0
        %465 = vmatpush1.msra.mxu0 %v433
        %466 = vmatprep.subr.mxu0 0.0
        %467 = vmatpush1.msra.mxu0 %v434
        %468 = vmatprep.subr.mxu0 0.0
        %469 = vmatpush1.msra.mxu0 %v435
        %470 = vmatprep.subr.mxu0 0.0
        %471 = vmatpush1.msra.mxu0 %v436
        %472 = vmatprep.subr.mxu0 0.0
        %473 = vmatpush1.msra.mxu0 %v437
        %474 = vmatprep.subr.mxu0 0.0
        %475 = vmatpush1.msra.mxu0 %v438
        %476 = vmatprep.subr.mxu0 0.0
        %477 = vmatpush1.msra.mxu0 %v439
        %478 = vmatprep.subr.mxu0 0.0
        %479 = vmatpush1.msra.mxu0 %v440
        %480 = vmatprep.subr.mxu0 0.0
        %481 = vmatpush1.msra.mxu0 0.0
        %482 = vmatprep.subr.mxu0 0.0
        %483 = vmatpush1.msra.mxu0 0.0
        %484 = vmatprep.subr.mxu0 0.0
        %485 = vmatpush1.msra.mxu0 0.0
        %486 = vmatprep.subr.mxu0 0.0
        %487 = vmatpush1.msra.mxu0 0.0
        %488 = vmatprep.subr.mxu0 0.0
        %489 = vmatpush1.msra.mxu0 0.0
        %490 = vmatprep.subr.mxu0 0.0
        %491 = vmatpush1.msra.mxu0 0.0
        %492 = vmatprep.subr.mxu0 0.0
        %493 = vmatpush1.msra.mxu0 0.0
        %494 = vmatprep.subr.mxu0 0.0
        %495 = vmatpush1.msra.mxu0 0.0
        %496 = vmatprep.subr.mxu0 0.0
        %497 = vmatpush1.msra.mxu0 0.0
        %498 = vmatprep.subr.mxu0 0.0
        %499 = vmatpush1.msra.mxu0 0.0
        %500 = vmatprep.subr.mxu0 0.0
        %501 = vmatpush1.msra.mxu0 0.0
        %502 = vmatprep.subr.mxu0 0.0
        %503 = vmatpush1.msra.mxu0 0.0
        %504 = vmatprep.subr.mxu0 0.0
        %505 = vmatpush1.msra.mxu0 0.0
        %506 = vmatprep.subr.mxu0 0.0
        %507 = vmatpush1.msra.mxu0 0.0
        %508 = vmatprep.subr.mxu0 0.0
        %509 = vmatpush1.msra.mxu0 0.0
        %510 = vmatprep.subr.mxu0 0.0
        %511 = vmatpush1.msra.mxu0 0.0
        %512 = vmatprep.mubr.f32.mxu0 0.0
        %513 = vmatmul.mubr.f32.gmra.mrb[0].mxu0 %v409
        %v514 = vpop.f32.mrb[0].mxu0
        %v515 = vadd.f32 %v446, %v514
        %v516 = vpop.f32.mrb[0].mxu0
        %517 = vmatprep.mubr.f32.mxu0 0.0
        %518 = vmatmul.mubr.f32.gmra.mrb[0].mxu0 %v410
        %v519 = vpop.f32.mrb[0].mxu0
        %v520 = vadd.f32 %v446, %v519
        %v521 = vpop.f32.mrb[0].mxu0
        %522 = vmatprep.mubr.f32.mxu0 0.0
        %523 = vmatmul.mubr.f32.gmra.mrb[0].mxu0 %v411
        %v524 = vpop.f32.mrb[0].mxu0
        %v525 = vadd.f32 %v446, %v524
        %v526 = vpop.f32.mrb[0].mxu0
        %527 = vmatprep.mubr.f32.mxu0 0.0
        %528 = vmatmul.mubr.f32.gmra.mrb[0].mxu0 %v412
        %v529 = vpop.f32.mrb[0].mxu0
        %v530 = vadd.f32 %v446, %v529
        %v531 = vpop.f32.mrb[0].mxu0
        %532 = vmatprep.mubr.f32.mxu0 0.0
        %533 = vmatmul.mubr.f32.gmra.mrb[0].mxu0 %v413
        %v534 = vpop.f32.mrb[0].mxu0
        %v535 = vadd.f32 %v446, %v534
        %v536 = vpop.f32.mrb[0].mxu0
        %537 = vmatprep.mubr.f32.mxu0 0.0
        %538 = vmatmul.mubr.f32.gmra.mrb[0].mxu0 %v414
        %v539 = vpop.f32.mrb[0].mxu0
        %v540 = vadd.f32 %v446, %v539
        %v541 = vpop.f32.mrb[0].mxu0
        %542 = vmatprep.mubr.f32.mxu0 0.0
        %543 = vmatmul.mubr.f32.gmra.mrb[0].mxu0 %v415
        %v544 = vpop.f32.mrb[0].mxu0
        %v545 = vadd.f32 %v446, %v544
        %v546 = vpop.f32.mrb[0].mxu0
        %547 = vmatprep.mubr.f32.mxu0 0.0
        %548 = vmatmul.mubr.f32.gmra.mrb[0].mxu0 %v416
        %v549 = vpop.f32.mrb[0].mxu0
        %v550 = vadd.f32 %v446, %v549
        %v551 = vpop.f32.mrb[0].mxu0
        %552 = vmatprep.mubr.f32.mxu0 0.0
        %553 = vmatmul.mubr.f32.gmra.mrb[0].mxu0 %v417
        %v554 = vpop.f32.mrb[0].mxu0
        %v555 = vadd.f32 %v446, %v554
        %v556 = vpop.f32.mrb[0].mxu0
        %557 = vmatprep.mubr.f32.mxu0 0.0
        %558 = vmatmul.mubr.f32.gmra.mrb[0].mxu0 %v418
        %v559 = vpop.f32.mrb[0].mxu0
        %v560 = vadd.f32 %v446, %v559
        %v561 = vpop.f32.mrb[0].mxu0
        %562 = vmatprep.mubr.f32.mxu0 0.0
        %563 = vmatmul.mubr.f32.gmra.mrb[0].mxu0 %v419
        %v564 = vpop.f32.mrb[0].mxu0
        %v565 = vadd.f32 %v446, %v564
        %v566 = vpop.f32.mrb[0].mxu0
        %567 = vmatprep.mubr.f32.mxu0 0.0
        %568 = vmatmul.mubr.f32.gmra.mrb[0].mxu0 %v420
        %v569 = vpop.f32.mrb[0].mxu0
        %v570 = vadd.f32 %v446, %v569
        %v571 = vpop.f32.mrb[0].mxu0
        %572 = vmatprep.mubr.f32.mxu0 0.0
        %573 = vmatmul.mubr.f32.gmra.mrb[0].mxu0 %v421
        %v574 = vpop.f32.mrb[0].mxu0
        %v575 = vadd.f32 %v446, %v574
        %v576 = vpop.f32.mrb[0].mxu0
        %577 = vmatprep.mubr.f32.mxu0 0.0
        %578 = vmatmul.mubr.f32.gmra.mrb[0].mxu0 %v422
        %v579 = vpop.f32.mrb[0].mxu0
        %v580 = vadd.f32 %v446, %v579
        %v581 = vpop.f32.mrb[0].mxu0
        %582 = vmatprep.mubr.f32.mxu0 0.0
        %583 = vmatmul.mubr.f32.gmra.mrb[0].mxu0 %v423
        %v584 = vpop.f32.mrb[0].mxu0
        %v585 = vadd.f32 %v446, %v584
        %v586 = vpop.f32.mrb[0].mxu0
        %587 = vmatprep.mubr.f32.mxu0 0.0
        %588 = vmatmul.mubr.f32.gmra.mrb[0].mxu0 %v424
        %v589 = vpop.f32.mrb[0].mxu0
        %v590 = vadd.f32 %v446, %v589
        %v591 = vpop.f32.mrb[0].mxu0
        %592 = vdwg.mxu0
        %v593 = vmax.f32 %v515, 0.0
        %v594 = vmax.f32 %v520, 0.0
        %v595 = vmax.f32 %v525, 0.0
        %v596 = vmax.f32 %v530, 0.0
        %v597 = vmax.f32 %v535, 0.0
        %v598 = vmax.f32 %v540, 0.0
        %v599 = vmax.f32 %v545, 0.0
        %v600 = vmax.f32 %v550, 0.0
        %v601 = vmax.f32 %v555, 0.0
        %v602 = vmax.f32 %v560, 0.0
        %v603 = vmax.f32 %v565, 0.0
        %v604 = vmax.f32 %v570, 0.0
        %v605 = vmax.f32 %v575, 0.0
        %v606 = vmax.f32 %v580, 0.0
        %v607 = vmax.f32 %v585, 0.0
        %v608 = vmax.f32 %v590, 0.0
        %v609 = vld [vmem:[#allocation7] sm:$0xff]
        %v610 = vld [vmem:[#allocation7 + $0x8] sm:$0xff]
        %v611 = vld [vmem:[#allocation7 + $0x10] sm:$0xff]
        %v612 = vld [vmem:[#allocation7 + $0x18] sm:$0xff]
        %v613 = vld [vmem:[#allocation7 + $0x20] sm:$0xff]
        %v614 = vld [vmem:[#allocation7 + $0x28] sm:$0xff]
        %v615 = vld [vmem:[#allocation7 + $0x30] sm:$0xff]
        %v616 = vld [vmem:[#allocation7 + $0x38] sm:$0xff]
        %v617 = vld [vmem:[#allocation7 + $0x40] sm:$0xff]
        %v618 = vld [vmem:[#allocation7 + $0x48] sm:$0xff]
        %v619 = vld [vmem:[#allocation7 + $0x50] sm:$0xff]
        %v620 = vld [vmem:[#allocation7 + $0x58] sm:$0xff]
        %v621 = vld [vmem:[#allocation7 + $0x60] sm:$0xff]
        %v622 = vld [vmem:[#allocation7 + $0x68] sm:$0xff]
        %v623 = vld [vmem:[#allocation7 + $0x70] sm:$0xff]
        %v624 = vld [vmem:[#allocation7 + $0x78] sm:$0xff]
        %v625 = vld [vmem:[%s4] sm:$0x1]
        %v627 = vlaneseq
        %v628 = vshrl.u32 %v627, 7
        %v629 = vsub.s32 0, %v628
        %v630 = vrot.slane %v625, %v629
        %632 = vmatprep.subr.mxu0 0.0
        %633 = vmatpush1.msra.mxu0 %v609
        %634 = vmatprep.subr.mxu0 0.0
        %635 = vmatpush1.msra.mxu0 %v610
        %636 = vmatprep.subr.mxu0 0.0
        %637 = vmatpush1.msra.mxu0 %v611
        %638 = vmatprep.subr.mxu0 0.0
        %639 = vmatpush1.msra.mxu0 %v612
        %640 = vmatprep.subr.mxu0 0.0
        %641 = vmatpush1.msra.mxu0 %v613
        %642 = vmatprep.subr.mxu0 0.0
        %643 = vmatpush1.msra.mxu0 %v614
        %644 = vmatprep.subr.mxu0 0.0
        %645 = vmatpush1.msra.mxu0 %v615
        %646 = vmatprep.subr.mxu0 0.0
        %647 = vmatpush1.msra.mxu0 %v616
        %648 = vmatprep.subr.mxu0 0.0
        %649 = vmatpush1.msra.mxu0 %v617
        %650 = vmatprep.subr.mxu0 0.0
        %651 = vmatpush1.msra.mxu0 %v618
        %652 = vmatprep.subr.mxu0 0.0
        %653 = vmatpush1.msra.mxu0 %v619
        %654 = vmatprep.subr.mxu0 0.0
        %655 = vmatpush1.msra.mxu0 %v620
        %656 = vmatprep.subr.mxu0 0.0
        %657 = vmatpush1.msra.mxu0 %v621
        %658 = vmatprep.subr.mxu0 0.0
        %659 = vmatpush1.msra.mxu0 %v622
        %660 = vmatprep.subr.mxu0 0.0
        %661 = vmatpush1.msra.mxu0 %v623
        %662 = vmatprep.subr.mxu0 0.0
        %663 = vmatpush1.msra.mxu0 %v624
        %664 = vmatprep.subr.mxu0 0.0
        %665 = vmatpush1.msra.mxu0 0.0
        %666 = vmatprep.subr.mxu0 0.0
        %667 = vmatpush1.msra.mxu0 0.0
        %668 = vmatprep.subr.mxu0 0.0
        %669 = vmatpush1.msra.mxu0 0.0
        %670 = vmatprep.subr.mxu0 0.0
        %671 = vmatpush1.msra.mxu0 0.0
        %672 = vmatprep.subr.mxu0 0.0
        %673 = vmatpush1.msra.mxu0 0.0
        %674 = vmatprep.subr.mxu0 0.0
        %675 = vmatpush1.msra.mxu0 0.0
        %676 = vmatprep.subr.mxu0 0.0
        %677 = vmatpush1.msra.mxu0 0.0
        %678 = vmatprep.subr.mxu0 0.0
        %679 = vmatpush1.msra.mxu0 0.0
        %680 = vmatprep.subr.mxu0 0.0
        %681 = vmatpush1.msra.mxu0 0.0
        %682 = vmatprep.subr.mxu0 0.0
        %683 = vmatpush1.msra.mxu0 0.0
        %684 = vmatprep.subr.mxu0 0.0
        %685 = vmatpush1.msra.mxu0 0.0
        %686 = vmatprep.subr.mxu0 0.0
        %687 = vmatpush1.msra.mxu0 0.0
        %688 = vmatprep.subr.mxu0 0.0
        %689 = vmatpush1.msra.mxu0 0.0
        %690 = vmatprep.subr.mxu0 0.0
        %691 = vmatpush1.msra.mxu0 0.0
        %692 = vmatprep.subr.mxu0 0.0
        %693 = vmatpush1.msra.mxu0 0.0
        %694 = vmatprep.subr.mxu0 0.0
        %695 = vmatpush1.msra.mxu0 0.0
        %696 = vmatprep.mubr.f32.mxu0 0.0
        %697 = vmatmul.mubr.f32.gmra.mrb[0].mxu0 %v593
        %v698 = vpop.f32.mrb[0].mxu0
        %v699 = vadd.f32 %v630, %v698
        %v700 = vpop.f32.mrb[0].mxu0
        %701 = vmatprep.mubr.f32.mxu0 0.0
        %702 = vmatmul.mubr.f32.gmra.mrb[0].mxu0 %v594
        %v703 = vpop.f32.mrb[0].mxu0
        %v704 = vadd.f32 %v630, %v703
        %v705 = vpop.f32.mrb[0].mxu0
        %706 = vmatprep.mubr.f32.mxu0 0.0
        %707 = vmatmul.mubr.f32.gmra.mrb[0].mxu0 %v595
        %v708 = vpop.f32.mrb[0].mxu0
        %v709 = vadd.f32 %v630, %v708
        %v710 = vpop.f32.mrb[0].mxu0
        %711 = vmatprep.mubr.f32.mxu0 0.0
        %712 = vmatmul.mubr.f32.gmra.mrb[0].mxu0 %v596
        %v713 = vpop.f32.mrb[0].mxu0
        %v714 = vadd.f32 %v630, %v713
        %v715 = vpop.f32.mrb[0].mxu0
        %716 = vmatprep.mubr.f32.mxu0 0.0
        %717 = vmatmul.mubr.f32.gmra.mrb[0].mxu0 %v597
        %v718 = vpop.f32.mrb[0].mxu0
        %v719 = vadd.f32 %v630, %v718
        %v720 = vpop.f32.mrb[0].mxu0
        %721 = vmatprep.mubr.f32.mxu0 0.0
        %722 = vmatmul.mubr.f32.gmra.mrb[0].mxu0 %v598
        %v723 = vpop.f32.mrb[0].mxu0
        %v724 = vadd.f32 %v630, %v723
        %v725 = vpop.f32.mrb[0].mxu0
        %726 = vmatprep.mubr.f32.mxu0 0.0
        %727 = vmatmul.mubr.f32.gmra.mrb[0].mxu0 %v599
        %v728 = vpop.f32.mrb[0].mxu0
        %v729 = vadd.f32 %v630, %v728
        %v730 = vpop.f32.mrb[0].mxu0
        %731 = vmatprep.mubr.f32.mxu0 0.0
        %732 = vmatmul.mubr.f32.gmra.mrb[0].mxu0 %v600
        %v733 = vpop.f32.mrb[0].mxu0
        %v734 = vadd.f32 %v630, %v733
        %v735 = vpop.f32.mrb[0].mxu0
        %736 = vmatprep.mubr.f32.mxu0 0.0
        %737 = vmatmul.mubr.f32.gmra.mrb[0].mxu0 %v601
        %v738 = vpop.f32.mrb[0].mxu0
        %v739 = vadd.f32 %v630, %v738
        %v740 = vpop.f32.mrb[0].mxu0
        %741 = vmatprep.mubr.f32.mxu0 0.0
        %742 = vmatmul.mubr.f32.gmra.mrb[0].mxu0 %v602
        %v743 = vpop.f32.mrb[0].mxu0
        %v744 = vadd.f32 %v630, %v743
        %v745 = vpop.f32.mrb[0].mxu0
        %746 = vmatprep.mubr.f32.mxu0 0.0
        %747 = vmatmul.mubr.f32.gmra.mrb[0].mxu0 %v603
        %v748 = vpop.f32.mrb[0].mxu0
        %v749 = vadd.f32 %v630, %v748
        %v750 = vpop.f32.mrb[0].mxu0
        %751 = vmatprep.mubr.f32.mxu0 0.0
        %752 = vmatmul.mubr.f32.gmra.mrb[0].mxu0 %v604
        %v753 = vpop.f32.mrb[0].mxu0
        %v754 = vadd.f32 %v630, %v753
        %v755 = vpop.f32.mrb[0].mxu0
        %756 = vmatprep.mubr.f32.mxu0 0.0
        %757 = vmatmul.mubr.f32.gmra.mrb[0].mxu0 %v605
        %v758 = vpop.f32.mrb[0].mxu0
        %v759 = vadd.f32 %v630, %v758
        %v760 = vpop.f32.mrb[0].mxu0
        %761 = vmatprep.mubr.f32.mxu0 0.0
        %762 = vmatmul.mubr.f32.gmra.mrb[0].mxu0 %v606
        %v763 = vpop.f32.mrb[0].mxu0
        %v764 = vadd.f32 %v630, %v763
        %v765 = vpop.f32.mrb[0].mxu0
        %766 = vmatprep.mubr.f32.mxu0 0.0
        %767 = vmatmul.mubr.f32.gmra.mrb[0].mxu0 %v607
        %v768 = vpop.f32.mrb[0].mxu0
        %v769 = vadd.f32 %v630, %v768
        %v770 = vpop.f32.mrb[0].mxu0
        %771 = vmatprep.mubr.f32.mxu0 0.0
        %772 = vmatmul.mubr.f32.gmra.mrb[0].mxu0 %v608
        %v773 = vpop.f32.mrb[0].mxu0
        %v774 = vadd.f32 %v630, %v773
        %v775 = vpop.f32.mrb[0].mxu0
        %776 = vdwg.mxu0
        %v777 = vld [vmem:[#allocation8] sm:$0xff]
        %v778 = vld [vmem:[#allocation8 + $0x8] sm:$0xff]
        %v779 = vld [vmem:[#allocation8 + $0x10] sm:$0xff]
        %v780 = vld [vmem:[#allocation8 + $0x18] sm:$0xff]
        %v781 = vld [vmem:[#allocation8 + $0x20] sm:$0xff]
        %v782 = vld [vmem:[#allocation8 + $0x28] sm:$0xff]
        %v783 = vld [vmem:[#allocation8 + $0x30] sm:$0xff]
        %v784 = vld [vmem:[#allocation8 + $0x38] sm:$0xff]
        %v785 = vld [vmem:[#allocation8 + $0x40] sm:$0xff]
        %v786 = vld [vmem:[#allocation8 + $0x48] sm:$0xff]
        %v787 = vld [vmem:[#allocation8 + $0x50] sm:$0xff]
        %v788 = vld [vmem:[#allocation8 + $0x58] sm:$0xff]
        %v789 = vld [vmem:[#allocation8 + $0x60] sm:$0xff]
        %v790 = vld [vmem:[#allocation8 + $0x68] sm:$0xff]
        %v791 = vld [vmem:[#allocation8 + $0x70] sm:$0xff]
        %v792 = vld [vmem:[#allocation8 + $0x78] sm:$0xff]
        %v793 = vld [vmem:[%s6] sm:$0x1]
        %v795 = vlaneseq
        %v796 = vshrl.u32 %v795, 7
        %v797 = vsub.s32 0, %v796
        %v798 = vrot.slane %v793, %v797
        %800 = vmatprep.subr.mxu0 0.0
        %801 = vmatpush1.msra.mxu0 %v777
        %802 = vmatprep.subr.mxu0 0.0
        %803 = vmatpush1.msra.mxu0 %v778
        %804 = vmatprep.subr.mxu0 0.0
        %805 = vmatpush1.msra.mxu0 %v779
        %806 = vmatprep.subr.mxu0 0.0
        %807 = vmatpush1.msra.mxu0 %v780
        %808 = vmatprep.subr.mxu0 0.0
        %809 = vmatpush1.msra.mxu0 %v781
        %810 = vmatprep.subr.mxu0 0.0
        %811 = vmatpush1.msra.mxu0 %v782
        %812 = vmatprep.subr.mxu0 0.0
        %813 = vmatpush1.msra.mxu0 %v783
        %814 = vmatprep.subr.mxu0 0.0
        %815 = vmatpush1.msra.mxu0 %v784
        %816 = vmatprep.subr.mxu0 0.0
        %817 = vmatpush1.msra.mxu0 %v785
        %818 = vmatprep.subr.mxu0 0.0
        %819 = vmatpush1.msra.mxu0 %v786
        %820 = vmatprep.subr.mxu0 0.0
        %821 = vmatpush1.msra.mxu0 %v787
        %822 = vmatprep.subr.mxu0 0.0
        %823 = vmatpush1.msra.mxu0 %v788
        %824 = vmatprep.subr.mxu0 0.0
        %825 = vmatpush1.msra.mxu0 %v789
        %826 = vmatprep.subr.mxu0 0.0
        %827 = vmatpush1.msra.mxu0 %v790
        %828 = vmatprep.subr.mxu0 0.0
        %829 = vmatpush1.msra.mxu0 %v791
        %830 = vmatprep.subr.mxu0 0.0
        %831 = vmatpush1.msra.mxu0 %v792
        %832 = vmatprep.subr.mxu0 0.0
        %833 = vmatpush1.msra.mxu0 0.0
        %834 = vmatprep.subr.mxu0 0.0
        %835 = vmatpush1.msra.mxu0 0.0
        %836 = vmatprep.subr.mxu0 0.0
        %837 = vmatpush1.msra.mxu0 0.0
        %838 = vmatprep.subr.mxu0 0.0
        %839 = vmatpush1.msra.mxu0 0.0
        %840 = vmatprep.subr.mxu0 0.0
        %841 = vmatpush1.msra.mxu0 0.0
        %842 = vmatprep.subr.mxu0 0.0
        %843 = vmatpush1.msra.mxu0 0.0
        %844 = vmatprep.subr.mxu0 0.0
        %845 = vmatpush1.msra.mxu0 0.0
        %846 = vmatprep.subr.mxu0 0.0
        %847 = vmatpush1.msra.mxu0 0.0
        %848 = vmatprep.subr.mxu0 0.0
        %849 = vmatpush1.msra.mxu0 0.0
        %850 = vmatprep.subr.mxu0 0.0
        %851 = vmatpush1.msra.mxu0 0.0
        %852 = vmatprep.subr.mxu0 0.0
        %853 = vmatpush1.msra.mxu0 0.0
        %854 = vmatprep.subr.mxu0 0.0
        %855 = vmatpush1.msra.mxu0 0.0
        %856 = vmatprep.subr.mxu0 0.0
        %857 = vmatpush1.msra.mxu0 0.0
        %858 = vmatprep.subr.mxu0 0.0
        %859 = vmatpush1.msra.mxu0 0.0
        %860 = vmatprep.subr.mxu0 0.0
        %861 = vmatpush1.msra.mxu0 0.0
        %862 = vmatprep.subr.mxu0 0.0
        %863 = vmatpush1.msra.mxu0 0.0
        %864 = vmatprep.mubr.f32.mxu0 0.0
        %865 = vmatmul.mubr.f32.gmra.mrb[0].mxu0 %v409
        %v866 = vpop.f32.mrb[0].mxu0
        %v867 = vadd.f32 %v798, %v866
        %v868 = vpop.f32.mrb[0].mxu0
        %869 = vmatprep.mubr.f32.mxu0 0.0
        %870 = vmatmul.mubr.f32.gmra.mrb[0].mxu0 %v410
        %v871 = vpop.f32.mrb[0].mxu0
        %v872 = vadd.f32 %v798, %v871
        %v873 = vpop.f32.mrb[0].mxu0
        %874 = vmatprep.mubr.f32.mxu0 0.0
        %875 = vmatmul.mubr.f32.gmra.mrb[0].mxu0 %v411
        %v876 = vpop.f32.mrb[0].mxu0
        %v877 = vadd.f32 %v798, %v876
        %v878 = vpop.f32.mrb[0].mxu0
        %879 = vmatprep.mubr.f32.mxu0 0.0
        %880 = vmatmul.mubr.f32.gmra.mrb[0].mxu0 %v412
        %v881 = vpop.f32.mrb[0].mxu0
        %v882 = vadd.f32 %v798, %v881
        %v883 = vpop.f32.mrb[0].mxu0
        %884 = vmatprep.mubr.f32.mxu0 0.0
        %885 = vmatmul.mubr.f32.gmra.mrb[0].mxu0 %v413
        %v886 = vpop.f32.mrb[0].mxu0
        %v887 = vadd.f32 %v798, %v886
        %v888 = vpop.f32.mrb[0].mxu0
        %889 = vmatprep.mubr.f32.mxu0 0.0
        %890 = vmatmul.mubr.f32.gmra.mrb[0].mxu0 %v414
        %v891 = vpop.f32.mrb[0].mxu0
        %v892 = vadd.f32 %v798, %v891
        %v893 = vpop.f32.mrb[0].mxu0
        %894 = vmatprep.mubr.f32.mxu0 0.0
        %895 = vmatmul.mubr.f32.gmra.mrb[0].mxu0 %v415
        %v896 = vpop.f32.mrb[0].mxu0
        %v897 = vadd.f32 %v798, %v896
        %v898 = vpop.f32.mrb[0].mxu0
        %899 = vmatprep.mubr.f32.mxu0 0.0
        %900 = vmatmul.mubr.f32.gmra.mrb[0].mxu0 %v416
        %v901 = vpop.f32.mrb[0].mxu0
        %v902 = vadd.f32 %v798, %v901
        %v903 = vpop.f32.mrb[0].mxu0
        %904 = vmatprep.mubr.f32.mxu0 0.0
        %905 = vmatmul.mubr.f32.gmra.mrb[0].mxu0 %v417
        %v906 = vpop.f32.mrb[0].mxu0
        %v907 = vadd.f32 %v798, %v906
        %v908 = vpop.f32.mrb[0].mxu0
        %909 = vmatprep.mubr.f32.mxu0 0.0
        %910 = vmatmul.mubr.f32.gmra.mrb[0].mxu0 %v418
        %v911 = vpop.f32.mrb[0].mxu0
        %v912 = vadd.f32 %v798, %v911
        %v913 = vpop.f32.mrb[0].mxu0
        %914 = vmatprep.mubr.f32.mxu0 0.0
        %915 = vmatmul.mubr.f32.gmra.mrb[0].mxu0 %v419
        %v916 = vpop.f32.mrb[0].mxu0
        %v917 = vadd.f32 %v798, %v916
        %v918 = vpop.f32.mrb[0].mxu0
        %919 = vmatprep.mubr.f32.mxu0 0.0
        %920 = vmatmul.mubr.f32.gmra.mrb[0].mxu0 %v420
        %v921 = vpop.f32.mrb[0].mxu0
        %v922 = vadd.f32 %v798, %v921
        %v923 = vpop.f32.mrb[0].mxu0
        %924 = vmatprep.mubr.f32.mxu0 0.0
        %925 = vmatmul.mubr.f32.gmra.mrb[0].mxu0 %v421
        %v926 = vpop.f32.mrb[0].mxu0
        %v927 = vadd.f32 %v798, %v926
        %v928 = vpop.f32.mrb[0].mxu0
        %929 = vmatprep.mubr.f32.mxu0 0.0
        %930 = vmatmul.mubr.f32.gmra.mrb[0].mxu0 %v422
        %v931 = vpop.f32.mrb[0].mxu0
        %v932 = vadd.f32 %v798, %v931
        %v933 = vpop.f32.mrb[0].mxu0
        %934 = vmatprep.mubr.f32.mxu0 0.0
        %935 = vmatmul.mubr.f32.gmra.mrb[0].mxu0 %v423
        %v936 = vpop.f32.mrb[0].mxu0
        %v937 = vadd.f32 %v798, %v936
        %v938 = vpop.f32.mrb[0].mxu0
        %939 = vmatprep.mubr.f32.mxu0 0.0
        %940 = vmatmul.mubr.f32.gmra.mrb[0].mxu0 %v424
        %v941 = vpop.f32.mrb[0].mxu0
        %v942 = vadd.f32 %v798, %v941
        %v943 = vpop.f32.mrb[0].mxu0
        %944 = vdwg.mxu0
        %v945 = vmax.f32 %v867, 0.0
        %v946 = vmax.f32 %v872, 0.0
        %v947 = vmax.f32 %v877, 0.0
        %v948 = vmax.f32 %v882, 0.0
        %v949 = vmax.f32 %v887, 0.0
        %v950 = vmax.f32 %v892, 0.0
        %v951 = vmax.f32 %v897, 0.0
        %v952 = vmax.f32 %v902, 0.0
        %v953 = vmax.f32 %v907, 0.0
        %v954 = vmax.f32 %v912, 0.0
        %v955 = vmax.f32 %v917, 0.0
        %v956 = vmax.f32 %v922, 0.0
        %v957 = vmax.f32 %v927, 0.0
        %v958 = vmax.f32 %v932, 0.0
        %v959 = vmax.f32 %v937, 0.0
        %v960 = vmax.f32 %v942, 0.0
        %v961 = vld [vmem:[#allocation10] sm:$0xff]
        %v962 = vld [vmem:[#allocation10 + $0x8] sm:$0xff]
        %v963 = vld [vmem:[#allocation10 + $0x10] sm:$0xff]
        %v964 = vld [vmem:[#allocation10 + $0x18] sm:$0xff]
        %v965 = vld [vmem:[#allocation10 + $0x20] sm:$0xff]
        %v966 = vld [vmem:[#allocation10 + $0x28] sm:$0xff]
        %v967 = vld [vmem:[#allocation10 + $0x30] sm:$0xff]
        %v968 = vld [vmem:[#allocation10 + $0x38] sm:$0xff]
        %v969 = vld [vmem:[#allocation10 + $0x40] sm:$0xff]
        %v970 = vld [vmem:[#allocation10 + $0x48] sm:$0xff]
        %v971 = vld [vmem:[#allocation10 + $0x50] sm:$0xff]
        %v972 = vld [vmem:[#allocation10 + $0x58] sm:$0xff]
        %v973 = vld [vmem:[#allocation10 + $0x60] sm:$0xff]
        %v974 = vld [vmem:[#allocation10 + $0x68] sm:$0xff]
        %v975 = vld [vmem:[#allocation10 + $0x70] sm:$0xff]
        %v976 = vld [vmem:[#allocation10 + $0x78] sm:$0xff]
        %v977 = vld [vmem:[%s8] sm:$0x1]
        %v979 = vlaneseq
        %v980 = vshrl.u32 %v979, 7
        %v981 = vsub.s32 0, %v980
        %v982 = vrot.slane %v977, %v981
        %984 = vmatprep.subr.mxu0 0.0
        %985 = vmatpush1.msra.mxu0 %v961
        %986 = vmatprep.subr.mxu0 0.0
        %987 = vmatpush1.msra.mxu0 %v962
        %988 = vmatprep.subr.mxu0 0.0
        %989 = vmatpush1.msra.mxu0 %v963
        %990 = vmatprep.subr.mxu0 0.0
        %991 = vmatpush1.msra.mxu0 %v964
        %992 = vmatprep.subr.mxu0 0.0
        %993 = vmatpush1.msra.mxu0 %v965
        %994 = vmatprep.subr.mxu0 0.0
        %995 = vmatpush1.msra.mxu0 %v966
        %996 = vmatprep.subr.mxu0 0.0
        %997 = vmatpush1.msra.mxu0 %v967
        %998 = vmatprep.subr.mxu0 0.0
        %999 = vmatpush1.msra.mxu0 %v968
        %1000 = vmatprep.subr.mxu0 0.0
        %1001 = vmatpush1.msra.mxu0 %v969
        %1002 = vmatprep.subr.mxu0 0.0
        %1003 = vmatpush1.msra.mxu0 %v970
        %1004 = vmatprep.subr.mxu0 0.0
        %1005 = vmatpush1.msra.mxu0 %v971
        %1006 = vmatprep.subr.mxu0 0.0
        %1007 = vmatpush1.msra.mxu0 %v972
        %1008 = vmatprep.subr.mxu0 0.0
        %1009 = vmatpush1.msra.mxu0 %v973
        %1010 = vmatprep.subr.mxu0 0.0
        %1011 = vmatpush1.msra.mxu0 %v974
        %1012 = vmatprep.subr.mxu0 0.0
        %1013 = vmatpush1.msra.mxu0 %v975
        %1014 = vmatprep.subr.mxu0 0.0
        %1015 = vmatpush1.msra.mxu0 %v976
        %1016 = vmatprep.subr.mxu0 0.0
        %1017 = vmatpush1.msra.mxu0 0.0
        %1018 = vmatprep.subr.mxu0 0.0
        %1019 = vmatpush1.msra.mxu0 0.0
        %1020 = vmatprep.subr.mxu0 0.0
        %1021 = vmatpush1.msra.mxu0 0.0
        %1022 = vmatprep.subr.mxu0 0.0
        %1023 = vmatpush1.msra.mxu0 0.0
        %1024 = vmatprep.subr.mxu0 0.0
        %1025 = vmatpush1.msra.mxu0 0.0
        %1026 = vmatprep.subr.mxu0 0.0
        %1027 = vmatpush1.msra.mxu0 0.0
        %1028 = vmatprep.subr.mxu0 0.0
        %1029 = vmatpush1.msra.mxu0 0.0
        %1030 = vmatprep.subr.mxu0 0.0
        %1031 = vmatpush1.msra.mxu0 0.0
        %1032 = vmatprep.subr.mxu0 0.0
        %1033 = vmatpush1.msra.mxu0 0.0
        %1034 = vmatprep.subr.mxu0 0.0
        %1035 = vmatpush1.msra.mxu0 0.0
        %1036 = vmatprep.subr.mxu0 0.0
        %1037 = vmatpush1.msra.mxu0 0.0
        %1038 = vmatprep.subr.mxu0 0.0
        %1039 = vmatpush1.msra.mxu0 0.0
        %1040 = vmatprep.subr.mxu0 0.0
        %1041 = vmatpush1.msra.mxu0 0.0
        %1042 = vmatprep.subr.mxu0 0.0
        %1043 = vmatpush1.msra.mxu0 0.0
        %1044 = vmatprep.subr.mxu0 0.0
        %1045 = vmatpush1.msra.mxu0 0.0
        %1046 = vmatprep.subr.mxu0 0.0
        %1047 = vmatpush1.msra.mxu0 0.0
        %1048 = vmatprep.mubr.f32.mxu0 0.0
        %1049 = vmatmul.mubr.f32.gmra.mrb[0].mxu0 %v945
        %v1050 = vpop.f32.mrb[0].mxu0
        %v1051 = vadd.f32 %v982, %v1050
        %v1052 = vpop.f32.mrb[0].mxu0
        %1053 = vmatprep.mubr.f32.mxu0 0.0
        %1054 = vmatmul.mubr.f32.gmra.mrb[0].mxu0 %v946
        %v1055 = vpop.f32.mrb[0].mxu0
        %v1056 = vadd.f32 %v982, %v1055
        %v1057 = vpop.f32.mrb[0].mxu0
        %1058 = vmatprep.mubr.f32.mxu0 0.0
        %1059 = vmatmul.mubr.f32.gmra.mrb[0].mxu0 %v947
        %v1060 = vpop.f32.mrb[0].mxu0
        %v1061 = vadd.f32 %v982, %v1060
        %v1062 = vpop.f32.mrb[0].mxu0
        %1063 = vmatprep.mubr.f32.mxu0 0.0
        %1064 = vmatmul.mubr.f32.gmra.mrb[0].mxu0 %v948
        %v1065 = vpop.f32.mrb[0].mxu0
        %v1066 = vadd.f32 %v982, %v1065
        %v1067 = vpop.f32.mrb[0].mxu0
        %1068 = vmatprep.mubr.f32.mxu0 0.0
        %1069 = vmatmul.mubr.f32.gmra.mrb[0].mxu0 %v949
        %v1070 = vpop.f32.mrb[0].mxu0
        %v1071 = vadd.f32 %v982, %v1070
        %v1072 = vpop.f32.mrb[0].mxu0
        %1073 = vmatprep.mubr.f32.mxu0 0.0
        %1074 = vmatmul.mubr.f32.gmra.mrb[0].mxu0 %v950
        %v1075 = vpop.f32.mrb[0].mxu0
        %v1076 = vadd.f32 %v982, %v1075
        %v1077 = vpop.f32.mrb[0].mxu0
        %1078 = vmatprep.mubr.f32.mxu0 0.0
        %1079 = vmatmul.mubr.f32.gmra.mrb[0].mxu0 %v951
        %v1080 = vpop.f32.mrb[0].mxu0
        %v1081 = vadd.f32 %v982, %v1080
        %v1082 = vpop.f32.mrb[0].mxu0
        %1083 = vmatprep.mubr.f32.mxu0 0.0
        %1084 = vmatmul.mubr.f32.gmra.mrb[0].mxu0 %v952
        %v1085 = vpop.f32.mrb[0].mxu0
        %v1086 = vadd.f32 %v982, %v1085
        %v1087 = vpop.f32.mrb[0].mxu0
        %1088 = vmatprep.mubr.f32.mxu0 0.0
        %1089 = vmatmul.mubr.f32.gmra.mrb[0].mxu0 %v953
        %v1090 = vpop.f32.mrb[0].mxu0
        %v1091 = vadd.f32 %v982, %v1090
        %v1092 = vpop.f32.mrb[0].mxu0
        %1093 = vmatprep.mubr.f32.mxu0 0.0
        %1094 = vmatmul.mubr.f32.gmra.mrb[0].mxu0 %v954
        %v1095 = vpop.f32.mrb[0].mxu0
        %v1096 = vadd.f32 %v982, %v1095
        %v1097 = vpop.f32.mrb[0].mxu0
        %1098 = vmatprep.mubr.f32.mxu0 0.0
        %1099 = vmatmul.mubr.f32.gmra.mrb[0].mxu0 %v955
        %v1100 = vpop.f32.mrb[0].mxu0
        %v1101 = vadd.f32 %v982, %v1100
        %v1102 = vpop.f32.mrb[0].mxu0
        %1103 = vmatprep.mubr.f32.mxu0 0.0
        %1104 = vmatmul.mubr.f32.gmra.mrb[0].mxu0 %v956
        %v1105 = vpop.f32.mrb[0].mxu0
        %v1106 = vadd.f32 %v982, %v1105
        %v1107 = vpop.f32.mrb[0].mxu0
        %1108 = vmatprep.mubr.f32.mxu0 0.0
        %1109 = vmatmul.mubr.f32.gmra.mrb[0].mxu0 %v957
        %v1110 = vpop.f32.mrb[0].mxu0
        %v1111 = vadd.f32 %v982, %v1110
        %v1112 = vpop.f32.mrb[0].mxu0
        %1113 = vmatprep.mubr.f32.mxu0 0.0
        %1114 = vmatmul.mubr.f32.gmra.mrb[0].mxu0 %v958
        %v1115 = vpop.f32.mrb[0].mxu0
        %v1116 = vadd.f32 %v982, %v1115
        %v1117 = vpop.f32.mrb[0].mxu0
        %1118 = vmatprep.mubr.f32.mxu0 0.0
        %1119 = vmatmul.mubr.f32.gmra.mrb[0].mxu0 %v959
        %v1120 = vpop.f32.mrb[0].mxu0
        %v1121 = vadd.f32 %v982, %v1120
        %v1122 = vpop.f32.mrb[0].mxu0
        %1123 = vmatprep.mubr.f32.mxu0 0.0
        %1124 = vmatmul.mubr.f32.gmra.mrb[0].mxu0 %v960
        %v1125 = vpop.f32.mrb[0].mxu0
        %v1126 = vadd.f32 %v982, %v1125
        %v1127 = vpop.f32.mrb[0].mxu0
        %1128 = vdwg.mxu0
        %1129 = vmatprep.subr.mxu0 0.0
        %1130 = vmatpush1.xpose.msra.mxu0 %v1051
        %1131 = vmatprep.subr.mxu0 0.0
        %1132 = vmatpush1.xpose.msra.mxu0 %v1056
        %1133 = vmatprep.subr.mxu0 0.0
        %1134 = vmatpush1.xpose.msra.mxu0 %v1061
        %1135 = vmatprep.subr.mxu0 0.0
        %1136 = vmatpush1.xpose.msra.mxu0 %v1066
        %1137 = vmatprep.subr.mxu0 0.0
        %1138 = vmatpush1.xpose.msra.mxu0 %v1071
        %1139 = vmatprep.subr.mxu0 0.0
        %1140 = vmatpush1.xpose.msra.mxu0 %v1076
        %1141 = vmatprep.subr.mxu0 0.0
        %1142 = vmatpush1.xpose.msra.mxu0 %v1081
        %1143 = vmatprep.subr.mxu0 0.0
        %1144 = vmatpush1.xpose.msra.mxu0 %v1086
        %1145 = vmatprep.subr.mxu0 0.0
        %1146 = vmatpush1.xpose.msra.mxu0 %v1091
        %1147 = vmatprep.subr.mxu0 0.0
        %1148 = vmatpush1.xpose.msra.mxu0 %v1096
        %1149 = vmatprep.subr.mxu0 0.0
        %1150 = vmatpush1.xpose.msra.mxu0 %v1101
        %1151 = vmatprep.subr.mxu0 0.0
        %1152 = vmatpush1.xpose.msra.mxu0 %v1106
        %1153 = vmatprep.subr.mxu0 0.0
        %1154 = vmatpush1.xpose.msra.mxu0 %v1111
        %1155 = vmatprep.subr.mxu0 0.0
        %1156 = vmatpush1.xpose.msra.mxu0 %v1116
        %1157 = vmatprep.subr.mxu0 0.0
        %1158 = vmatpush1.xpose.msra.mxu0 %v1121
        %1159 = vmatprep.subr.mxu0 0.0
        %1160 = vmatpush1.xpose.msra.mxu0 %v1126
        %1161 = vmatprep.subr.mxu0 0.0
        %1162 = vmatpush1.xpose.msra.mxu0 0.0
        %1163 = vmatprep.subr.mxu0 0.0
        %1164 = vmatpush1.xpose.msra.mxu0 0.0
        %1165 = vmatprep.subr.mxu0 0.0
        %1166 = vmatpush1.xpose.msra.mxu0 0.0
        %1167 = vmatprep.subr.mxu0 0.0
        %1168 = vmatpush1.xpose.msra.mxu0 0.0
        %1169 = vmatprep.subr.mxu0 0.0
        %1170 = vmatpush1.xpose.msra.mxu0 0.0
        %1171 = vmatprep.subr.mxu0 0.0
        %1172 = vmatpush1.xpose.msra.mxu0 0.0
        %1173 = vmatprep.subr.mxu0 0.0
        %1174 = vmatpush1.xpose.msra.mxu0 0.0
        %1175 = vmatprep.subr.mxu0 0.0
        %1176 = vmatpush1.xpose.msra.mxu0 0.0
        %1177 = vmatprep.subr.mxu0 0.0
        %1178 = vmatpush1.xpose.msra.mxu0 0.0
        %1179 = vmatprep.subr.mxu0 0.0
        %1180 = vmatpush1.xpose.msra.mxu0 0.0
        %1181 = vmatprep.subr.mxu0 0.0
        %1182 = vmatpush1.xpose.msra.mxu0 0.0
        %1183 = vmatprep.subr.mxu0 0.0
        %1184 = vmatpush1.xpose.msra.mxu0 0.0
        %1185 = vmatprep.subr.mxu0 0.0
        %1186 = vmatpush1.xpose.msra.mxu0 0.0
        %1187 = vmatprep.subr.mxu0 0.0
        %1188 = vmatpush1.xpose.msra.mxu0 0.0
        %1189 = vmatprep.subr.mxu0 0.0
        %1190 = vmatpush1.xpose.msra.mxu0 0.0
        %1191 = vmatprep.subr.mxu0 0.0
        %1192 = vmatpush1.xpose.msra.mxu0 0.0
        %1193 = vmatprep.mubr.f32.mxu0 0.0
        %1194 = vmatmul.mubr.f32.gmra.mrb[0].mxu0 %v699
        %v1195 = vpop.f32.mrb[0].mxu0
        %v1196 = vadd.f32 0.0, %v1195
        %v1197 = vpop.f32.mrb[0].mxu0
        %1198 = vmatprep.mubr.f32.mxu0 0.0
        %1199 = vmatmul.mubr.f32.gmra.mrb[0].mxu0 %v704
        %v1200 = vpop.f32.mrb[0].mxu0
        %v1201 = vadd.f32 0.0, %v1200
        %v1202 = vpop.f32.mrb[0].mxu0
        %1203 = vmatprep.mubr.f32.mxu0 0.0
        %1204 = vmatmul.mubr.f32.gmra.mrb[0].mxu0 %v709
        %v1205 = vpop.f32.mrb[0].mxu0
        %v1206 = vadd.f32 0.0, %v1205
        %v1207 = vpop.f32.mrb[0].mxu0
        %1208 = vmatprep.mubr.f32.mxu0 0.0
        %1209 = vmatmul.mubr.f32.gmra.mrb[0].mxu0 %v714
        %v1210 = vpop.f32.mrb[0].mxu0
        %v1211 = vadd.f32 0.0, %v1210
        %v1212 = vpop.f32.mrb[0].mxu0
        %1213 = vmatprep.mubr.f32.mxu0 0.0
        %1214 = vmatmul.mubr.f32.gmra.mrb[0].mxu0 %v719
        %v1215 = vpop.f32.mrb[0].mxu0
        %v1216 = vadd.f32 0.0, %v1215
        %v1217 = vpop.f32.mrb[0].mxu0
        %1218 = vmatprep.mubr.f32.mxu0 0.0
        %1219 = vmatmul.mubr.f32.gmra.mrb[0].mxu0 %v724
        %v1220 = vpop.f32.mrb[0].mxu0
        %v1221 = vadd.f32 0.0, %v1220
        %v1222 = vpop.f32.mrb[0].mxu0
        %1223 = vmatprep.mubr.f32.mxu0 0.0
        %1224 = vmatmul.mubr.f32.gmra.mrb[0].mxu0 %v729
        %v1225 = vpop.f32.mrb[0].mxu0
        %v1226 = vadd.f32 0.0, %v1225
        %v1227 = vpop.f32.mrb[0].mxu0
        %1228 = vmatprep.mubr.f32.mxu0 0.0
        %1229 = vmatmul.mubr.f32.gmra.mrb[0].mxu0 %v734
        %v1230 = vpop.f32.mrb[0].mxu0
        %v1231 = vadd.f32 0.0, %v1230
        %v1232 = vpop.f32.mrb[0].mxu0
        %1233 = vmatprep.mubr.f32.mxu0 0.0
        %1234 = vmatmul.mubr.f32.gmra.mrb[0].mxu0 %v739
        %v1235 = vpop.f32.mrb[0].mxu0
        %v1236 = vadd.f32 0.0, %v1235
        %v1237 = vpop.f32.mrb[0].mxu0
        %1238 = vmatprep.mubr.f32.mxu0 0.0
        %1239 = vmatmul.mubr.f32.gmra.mrb[0].mxu0 %v744
        %v1240 = vpop.f32.mrb[0].mxu0
        %v1241 = vadd.f32 0.0, %v1240
        %v1242 = vpop.f32.mrb[0].mxu0
        %1243 = vmatprep.mubr.f32.mxu0 0.0
        %1244 = vmatmul.mubr.f32.gmra.mrb[0].mxu0 %v749
        %v1245 = vpop.f32.mrb[0].mxu0
        %v1246 = vadd.f32 0.0, %v1245
        %v1247 = vpop.f32.mrb[0].mxu0
        %1248 = vmatprep.mubr.f32.mxu0 0.0
        %1249 = vmatmul.mubr.f32.gmra.mrb[0].mxu0 %v754
        %v1250 = vpop.f32.mrb[0].mxu0
        %v1251 = vadd.f32 0.0, %v1250
        %v1252 = vpop.f32.mrb[0].mxu0
        %1253 = vmatprep.mubr.f32.mxu0 0.0
        %1254 = vmatmul.mubr.f32.gmra.mrb[0].mxu0 %v759
        %v1255 = vpop.f32.mrb[0].mxu0
        %v1256 = vadd.f32 0.0, %v1255
        %v1257 = vpop.f32.mrb[0].mxu0
        %1258 = vmatprep.mubr.f32.mxu0 0.0
        %1259 = vmatmul.mubr.f32.gmra.mrb[0].mxu0 %v764
        %v1260 = vpop.f32.mrb[0].mxu0
        %v1261 = vadd.f32 0.0, %v1260
        %v1262 = vpop.f32.mrb[0].mxu0
        %1263 = vmatprep.mubr.f32.mxu0 0.0
        %1264 = vmatmul.mubr.f32.gmra.mrb[0].mxu0 %v769
        %v1265 = vpop.f32.mrb[0].mxu0
        %v1266 = vadd.f32 0.0, %v1265
        %v1267 = vpop.f32.mrb[0].mxu0
        %1268 = vmatprep.mubr.f32.mxu0 0.0
        %1269 = vmatmul.mubr.f32.gmra.mrb[0].mxu0 %v774
        %v1270 = vpop.f32.mrb[0].mxu0
        %v1271 = vadd.f32 0.0, %v1270
        %v1272 = vpop.f32.mrb[0].mxu0
        %1273 = vdwg.mxu0
        %v1274 = vxor.u32 %v1196, 2147483648
        %v1275 = vxor.u32 %v1201, 2147483648
        %v1276 = vxor.u32 %v1206, 2147483648
        %v1277 = vxor.u32 %v1211, 2147483648
        %v1278 = vxor.u32 %v1216, 2147483648
        %v1279 = vxor.u32 %v1221, 2147483648
        %v1280 = vxor.u32 %v1226, 2147483648
        %v1281 = vxor.u32 %v1231, 2147483648
        %v1282 = vxor.u32 %v1236, 2147483648
        %v1283 = vxor.u32 %v1241, 2147483648
        %v1284 = vxor.u32 %v1246, 2147483648
        %v1285 = vxor.u32 %v1251, 2147483648
        %v1286 = vxor.u32 %v1256, 2147483648
        %v1287 = vxor.u32 %v1261, 2147483648
        %v1288 = vxor.u32 %v1266, 2147483648
        %v1289 = vxor.u32 %v1271, 2147483648
        %v1290 = vmul.f32 %v1274, 1.442695
        %v1291 = vpow.pop %v1290
        %v1292 = vmul.f32 %v1275, 1.442695
        %v1293 = vpow.pop %v1292
        %v1294 = vmul.f32 %v1276, 1.442695
        %v1295 = vpow.pop %v1294
        %v1296 = vmul.f32 %v1277, 1.442695
        %v1297 = vpow.pop %v1296
        %v1298 = vmul.f32 %v1278, 1.442695
        %v1299 = vpow.pop %v1298
        %v1300 = vmul.f32 %v1279, 1.442695
        %v1301 = vpow.pop %v1300
        %v1302 = vmul.f32 %v1280, 1.442695
        %v1303 = vpow.pop %v1302
        %v1304 = vmul.f32 %v1281, 1.442695
        %v1305 = vpow.pop %v1304
        %v1306 = vmul.f32 %v1282, 1.442695
        %v1307 = vpow.pop %v1306
        %v1308 = vmul.f32 %v1283, 1.442695
        %v1309 = vpow.pop %v1308
        %v1310 = vmul.f32 %v1284, 1.442695
        %v1311 = vpow.pop %v1310
        %v1312 = vmul.f32 %v1285, 1.442695
        %v1313 = vpow.pop %v1312
        %v1314 = vmul.f32 %v1286, 1.442695
        %v1315 = vpow.pop %v1314
        %v1316 = vmul.f32 %v1287, 1.442695
        %v1317 = vpow.pop %v1316
        %v1318 = vmul.f32 %v1288, 1.442695
        %v1319 = vpow.pop %v1318
        %v1320 = vmul.f32 %v1289, 1.442695
        %v1321 = vpow.pop %v1320
        %v1322 = vadd.f32 %v1291, 1.0
        %v1323 = vadd.f32 %v1293, 1.0
        %v1324 = vadd.f32 %v1295, 1.0
        %v1325 = vadd.f32 %v1297, 1.0
        %v1326 = vadd.f32 %v1299, 1.0
        %v1327 = vadd.f32 %v1301, 1.0
        %v1328 = vadd.f32 %v1303, 1.0
        %v1329 = vadd.f32 %v1305, 1.0
        %v1330 = vadd.f32 %v1307, 1.0
        %v1331 = vadd.f32 %v1309, 1.0
        %v1332 = vadd.f32 %v1311, 1.0
        %v1333 = vadd.f32 %v1313, 1.0
        %v1334 = vadd.f32 %v1315, 1.0
        %v1335 = vadd.f32 %v1317, 1.0
        %v1336 = vadd.f32 %v1319, 1.0
        %v1337 = vadd.f32 %v1321, 1.0
        %v1338 = vrcp.pop %v1322
        %v1339 = vmul.f32 1.0, %v1338
        %v1340 = vrcp.pop %v1323
        %v1341 = vmul.f32 1.0, %v1340
        %v1342 = vrcp.pop %v1324
        %v1343 = vmul.f32 1.0, %v1342
        %v1344 = vrcp.pop %v1325
        %v1345 = vmul.f32 1.0, %v1344
        %v1346 = vrcp.pop %v1326
        %v1347 = vmul.f32 1.0, %v1346
        %v1348 = vrcp.pop %v1327
        %v1349 = vmul.f32 1.0, %v1348
        %v1350 = vrcp.pop %v1328
        %v1351 = vmul.f32 1.0, %v1350
        %v1352 = vrcp.pop %v1329
        %v1353 = vmul.f32 1.0, %v1352
        %v1354 = vrcp.pop %v1330
        %v1355 = vmul.f32 1.0, %v1354
        %v1356 = vrcp.pop %v1331
        %v1357 = vmul.f32 1.0, %v1356
        %v1358 = vrcp.pop %v1332
        %v1359 = vmul.f32 1.0, %v1358
        %v1360 = vrcp.pop %v1333
        %v1361 = vmul.f32 1.0, %v1360
        %v1362 = vrcp.pop %v1334
        %v1363 = vmul.f32 1.0, %v1362
        %v1364 = vrcp.pop %v1335
        %v1365 = vmul.f32 1.0, %v1364
        %v1366 = vrcp.pop %v1336
        %v1367 = vmul.f32 1.0, %v1366
        %v1368 = vrcp.pop %v1337
        %v1369 = vmul.f32 1.0, %v1368
        %1370 = vst [vmem:[%s408] sm:$0xff] %v1339
        %1371 = vst [vmem:[%s408 + $0x8] sm:$0xff] %v1341
        %1372 = vst [vmem:[%s408 + $0x10] sm:$0xff] %v1343
        %1373 = vst [vmem:[%s408 + $0x18] sm:$0xff] %v1345
        %1374 = vst [vmem:[%s408 + $0x20] sm:$0xff] %v1347
        %1375 = vst [vmem:[%s408 + $0x28] sm:$0xff] %v1349
        %1376 = vst [vmem:[%s408 + $0x30] sm:$0xff] %v1351
        %1377 = vst [vmem:[%s408 + $0x38] sm:$0xff] %v1353
        %1378 = vst [vmem:[%s408 + $0x40] sm:$0xff] %v1355
        %1379 = vst [vmem:[%s408 + $0x48] sm:$0xff] %v1357
        %1380 = vst [vmem:[%s408 + $0x50] sm:$0xff] %v1359
        %1381 = vst [vmem:[%s408 + $0x58] sm:$0xff] %v1361
        %1382 = vst [vmem:[%s408 + $0x60] sm:$0xff] %v1363
        %1383 = vst [vmem:[%s408 + $0x68] sm:$0xff] %v1365
        %1384 = vst [vmem:[%s408 + $0x70] sm:$0xff] %v1367
        %1385 = vst [vmem:[%s408 + $0x78] sm:$0xff] %v1369
        %s1386 = sand.u32 %s230, 1
        %s1387 = scalar_lea.sflag [#allocation4], %s1386
        %s1388 = sand.u32 %s230, 1
        %s1389 = smul.addr %s1388, 128
        %s1390 = scalar_lea.vmem [#allocation11], %s1389
        // Predicated region
        $region77: #{tpu_custom_call.1} parent=55 // pred_check
          %p1391 = pneg %p240
        $region78: #{tpu_custom_call.1} parent=55 // pred_check_branch
          %1393 = sbr.rel (%p1391) target = $region80
        $region79: #{tpu_custom_call.1} parent=55 // pred_region
          %s1395 = ssub.s32 2048, 2048
          %1396 = vsyncadd %s1387, %s1395
          %s1397 = smul.addr %s28, 16
          %s1398 = smul.addr %s1397, 128
          %s1399 = scalar_lea.hbm %s9, %s1398
          %s1400 = sshll.u32 %s1390, 4
          %s1401 = int_to_ptr.vmem [resolvable:$true] %s1400
          %1406 = dma.vmem_to_hbm [thread:$0]  %s1401, 2048, %s1399, %s1387, 128, 128, 8
        $region80: #{tpu_custom_call.1} parent=55 // pred_fallthru
          _
      $region56: #{tpu_custom_call.1} parent=5 // pred_fallthru
        _
      %p1407 = scmp.le.s32.totalorder 2, %s23
      // Predicated region
      $region81: #{tpu_custom_call.1} parent=5 // pred_check
        %p1408 = pneg %p1407
      $region82: #{tpu_custom_call.1} parent=5 // pred_check_branch
        %1410 = sbr.rel (%p1408) target = $region84
      $region83: #{tpu_custom_call.1} parent=5 // pred_region
        %s1411 = ssub.s32 %s23, 2
        // Predicated region
        $region85: #{tpu_custom_call.1} parent=83 // pred_check
          %p1412 = pneg %p246
        $region86: #{tpu_custom_call.1} parent=83 // pred_check_branch
          %1414 = sbr.rel (%p1412) target = $region88
        $region87: #{tpu_custom_call.1} parent=83 // pred_region
          %s1415 = sand.u32 %s231, 1
          %s1416 = scalar_lea.sflag [#allocation4], %s1415
          %s1417 = sand.u32 %s231, 1
          %s1418 = smul.addr %s1417, 128
          %s1419 = scalar_lea.vmem [#allocation11], %s1418
          %1420 = dma.done %s1416, 2048
        $region88: #{tpu_custom_call.1} parent=83 // pred_fallthru
          _
      $region84: #{tpu_custom_call.1} parent=5 // pred_fallthru
        _
    $region6: #{tpu_custom_call.1} parent=1 // loop_footer
      %s27 = sadd.s32 1, %s23
    $region7: #{tpu_custom_call.1} parent=1 // loop_footer_branch
      %22 = sbr.rel target = $region3
    $region8: #{tpu_custom_call.1} parent=1 // loop_exit
      _
    %1421 = vsyncpa [#allocation3], 1
    %s1422 = scalar_lea.sflag [#allocation3], 1
    %1423 = vsyncpa %s1422, 1
    %1424 = vsyncpa [#allocation6], 1
    %1425 = vsyncpa [#allocation9], 1
    %1426 = vsyncpa [#allocation4], 1
    %s1427 = scalar_lea.sflag [#allocation4], 1
    %1428 = vsyncpa %s1427, 1

</llo_original>
